<compile_context>
chip_gen: v7x
topology: tpu7x:2x2x1
jax: 0.10.0
libtpu: 0.0.40
codegen_flags: <defaults>
</compile_context>

<pallas_src>
import functools

import jax
import jax.numpy as jnp
from jax import lax
from jax.experimental import pallas as pl
from jax.experimental.pallas import tpu as pltpu


def _round_up(x, m):
    return (x + m - 1) // m * m


def embeddings_kernel(ids_ref, taus_ref,                 # streamed (tile_n, 2) blocks
                      tok_table_ref, ptype_table_ref,    # resident VMEM tables
                      t2v_wb_ref,                        # resident (8, H): w_age,b_age,w_abs,b_abs
                      alphas_ref, flag_ref,              # SMEM scalars
                      out_ref,                           # (tile_n, H)
                      *, use_take):
    H = out_ref.shape[1]

    ids = ids_ref[...]                      # (tile_n, 2) int32: [token_id, partner_id]
    pt_col = ids[:, 1:2]                    # (tile_n, 1)

    # ---- token gather: vectorized, exact f32 (no per-row loop) -------------
    table = tok_table_ref[...]              # (V, H) f32, VMEM-resident
    if use_take:
        tok_rows = jnp.take(table, ids[:, 0], axis=0)             # (tile_n, H)
    else:
        # Fallback: exact one-hot gather on the (otherwise idle) MXU.
        # precision=HIGHEST keeps f32 table values exact through the bf16
        # pass decomposition (one-hot entries are 0/1).
        V = table.shape[0]
        onehot = (ids[:, 0:1] ==
                  lax.broadcasted_iota(jnp.int32, (ids.shape[0], V), 1)
                  ).astype(jnp.float32)
        tok_rows = jnp.dot(onehot, table, preferred_element_type=jnp.float32,
                           precision=lax.Precision.HIGHEST)

    # ---- partner-type gather: only rows {0,1,2} exist -> 3-way select ------
    row0 = ptype_table_ref[0:1, :]
    row1 = ptype_table_ref[1:2, :]
    row2 = ptype_table_ref[2:3, :]
    ptype_rows = jnp.where(pt_col == 0, row0,
                           jnp.where(pt_col == 1, row1, row2))    # (tile_n, H)

    a_age = alphas_ref[0]
    a_abs = alphas_ref[1]

    def t2v_terms():
        # Grid-invariant periodic-lane mask, built (1, H) and broadcast.
        lane = lax.broadcasted_iota(jnp.int32, (1, H), 1)
        is_periodic = lane < (H - 1)                    # last lane is linear
        age = taus_ref[:, 0:1]                          # (tile_n, 1)
        pos = taus_ref[:, 1:2]                          # (tile_n, 1)
        w_age = t2v_wb_ref[0:1, :]
        b_age = t2v_wb_ref[1:2, :]
        w_abs = t2v_wb_ref[2:3, :]
        b_abs = t2v_wb_ref[3:4, :]
        v_age = age * w_age + b_age                     # (tile_n, H)
        t_age = jnp.where(is_periodic, jnp.cos(v_age), v_age)
        v_abs = pos * w_abs + b_abs
        t_abs = jnp.where(is_periodic, jnp.sin(v_abs), v_abs)
        return t_age, t_abs

    # ReZero alphas init to 0: skip the whole cos/sin (EUP) epilogue then.
    # Single full-tile store on either path (no out_ref read-modify-write).
    @pl.when(flag_ref[0] != 0)
    def _():
        t_age, t_abs = t2v_terms()
        out_ref[...] = ((tok_rows + a_age * t_age) + a_abs * t_abs) + ptype_rows

    @pl.when(flag_ref[0] == 0)
    def _():
        out_ref[...] = tok_rows + ptype_rows


_GATHER_MODE_CACHE = {"mode": None}


def embeddings_forward(tokens, position, age, partner_type, params, *,
                       tile_n=1024, gather="auto"):
    """tokens/position/age/partner_type: (B, S). Returns ((B, S, H), None)."""
    B, S = tokens.shape
    V, H = params["tok_table"].shape
    N = B * S

    # Row tile: multiple of 8, no larger than the (padded) problem size.
    tile_n = max(8, min(_round_up(tile_n, 8), _round_up(N, 8)))

    # --- generation-aware VMEM budget (v7x: 64 MiB; v5e/v6e: 128 MiB) -------
    try:
        vmem_cap = int(pltpu.get_tpu_info().vmem_capacity_bytes)
    except Exception:
        vmem_cap = 128 * 1024 * 1024
    budget = (vmem_cap * 3) // 4
    lane_h = _round_up(H, 128)
    # Resident blocks (constant index_map) are never re-fetched but are still
    # double-buffered by the default pipeline.
    # TODO(synk): pipeline_mode=pl.Buffered(1) on the resident blocks would
    # halve this footprint (matters on v7x); kept default for lowering safety.
    resident = 2 * (_round_up(V, 8) + 8 + 8) * lane_h * 4

    def stream_bytes(tn):                      # ids + taus + out, double-buffered
        return 2 * tn * (128 * 4 + 128 * 4 + lane_h * 4)

    while tile_n > 8 and resident + stream_bytes(tile_n) > budget:
        tile_n = _round_up(tile_n // 2, 8)
    vmem_limit = int(min(max(resident + stream_bytes(tile_n) + (2 << 20), 16 << 20),
                         budget))
    # TODO(synk): for vocabularies whose table exceeds the VMEM budget (esp.
    # v7x 64 MiB), keep tok_table in HBM (memory_space=pl.ANY) and DMA-gather
    # the tile's rows with a small ring of make_async_copy instead.

    num_tiles = pl.cdiv(N, tile_n)
    n_pad = num_tiles * tile_n

    def pad_rows(x):
        return jnp.pad(x, ((0, n_pad - N),) + ((0, 0),) * (x.ndim - 1))

    # Streamed per-row data (rides the BlockSpec pipeline with the output).
    ids = pad_rows(jnp.stack([tokens.reshape(N).astype(jnp.int32),
                              partner_type.reshape(N).astype(jnp.int32)], axis=-1))
    taus = pad_rows(jnp.stack([age.reshape(N).astype(jnp.float32),
                               position.reshape(N).astype(jnp.float32)], axis=-1))

    # Resident blocks.
    tok_table = params["tok_table"].astype(jnp.float32)
    ptype_table = params["ptype_table"].astype(jnp.float32)
    if ptype_table.shape[0] < 8:
        ptype_table = jnp.concatenate(
            [ptype_table, jnp.zeros((8 - ptype_table.shape[0], H), jnp.float32)], axis=0)
    t2v_wb = jnp.concatenate([params["w_age_full"], params["b_age_full"],
                              params["w_abs_full"], params["b_abs_full"],
                              jnp.zeros((4, H), jnp.float32)], axis=0)      # (8, H)

    alphas = jnp.stack([params["alpha_age"].reshape(()),
                        params["alpha_abs"].reshape(())]).astype(jnp.float32)
    t2v_flag = jnp.any(alphas != 0.0).astype(jnp.int32).reshape(1)

    in_specs = [
        pl.BlockSpec((tile_n, 2), lambda i: (i, 0)),           # ids (streamed)
        pl.BlockSpec((tile_n, 2), lambda i: (i, 0)),           # taus (streamed)
        pl.BlockSpec((V, H), lambda i: (0, 0)),                # token table (resident)
        pl.BlockSpec((8, H), lambda i: (0, 0)),                # partner table (resident)
        pl.BlockSpec((8, H), lambda i: (0, 0)),                # packed Time2Vec w/b
        pl.BlockSpec(memory_space=pltpu.MemorySpace.SMEM),     # alphas
        pl.BlockSpec(memory_space=pltpu.MemorySpace.SMEM),     # t2v-needed flag
    ]
    # TODO(synk): when 128 % H == 0 a lane-dense (n_pad//k, k*H) output repack
    # would turn masked vst.msk stores into full-width stores (biggest win on
    # v5e); the in-kernel sublane->lane relayout it needs is left out here for
    # lowering safety.
    out_spec = pl.BlockSpec((tile_n, H), lambda i: (i, 0))

    def run(use_take):
        kernel = functools.partial(embeddings_kernel, use_take=use_take)
        return pl.pallas_call(
            kernel,
            out_shape=jax.ShapeDtypeStruct((n_pad, H), jnp.float32),
            grid=(num_tiles,),
            in_specs=in_specs,
            out_specs=out_spec,
            compiler_params=pltpu.CompilerParams(
                dimension_semantics=("parallel",),
                vmem_limit_bytes=vmem_limit),
        )(ids, taus, tok_table, ptype_table, t2v_wb, alphas, t2v_flag)

    mode = gather if gather != "auto" else _GATHER_MODE_CACHE["mode"]
    if mode is not None:
        out = run(mode == "take")
    else:
        try:
            out = run(True)
            _GATHER_MODE_CACHE["mode"] = "take"
        except Exception:
            out = run(False)
            _GATHER_MODE_CACHE["mode"] = "onehot"

    # TODO(synk): nn.Dropout omitted (eval-mode identity); training dropout is stochastic.
    return out[:N].reshape(B, S, H), None


def make_params(key, vocab_size, hidden_size):
    d = 0.01
    keys = jax.random.split(key, 12)
    H = hidden_size

    # token embedding: uniform(-d, d) everywhere (padding row overwritten, as in PyTorch)
    tok_table = jax.random.uniform(keys[0], (vocab_size, H), jnp.float32, -d, d)

    # partner_type embedding: default N(0,1) init, padding row 0 zeroed; pad rows to 8
    ptype = jax.random.normal(keys[1], (3, H), jnp.float32)
    ptype = ptype.at[0].set(0.0)
    ptype_table = jnp.concatenate([ptype, jnp.zeros((5, H), jnp.float32)], axis=0)

    def t2v_params(kw, kb, kw0, kb0):
        w = jax.random.uniform(kw, (1, H - 1), jnp.float32, -d, d)
        b = jax.random.uniform(kb, (1, H - 1), jnp.float32, -d, d)
        w0 = jax.random.uniform(kw0, (1, 1), jnp.float32, -d, d)
        b0 = jax.random.uniform(kb0, (1, 1), jnp.float32, -d, d)
        return jnp.concatenate([w, w0], axis=-1), jnp.concatenate([b, b0], axis=-1)

    w_age_full, b_age_full = t2v_params(keys[2], keys[3], keys[4], keys[5])
    w_abs_full, b_abs_full = t2v_params(keys[6], keys[7], keys[8], keys[9])

    # ReZero(simple=True, fill=0): scalar alpha initialized to 0
    alpha_age = jnp.zeros((1, 1), jnp.float32)
    alpha_abs = jnp.zeros((1, 1), jnp.float32)

    return dict(tok_table=tok_table, ptype_table=ptype_table,
                w_age_full=w_age_full, b_age_full=b_age_full,
                w_abs_full=w_abs_full, b_abs_full=b_abs_full,
                alpha_age=alpha_age, alpha_abs=alpha_abs)


def reference_forward(tokens, position, age, partner_type, params):
    """Pure-JAX reference mirroring the PyTorch forward (eval mode)."""
    H = params["tok_table"].shape[1]
    tok = params["tok_table"][tokens]                                  # (B,S,H)

    def t2v(tau, f, w_full, b_full):
        v = tau[..., None] * w_full[0] + b_full[0]                     # (B,S,H)
        per = f(v[..., : H - 1])
        lin = v[..., H - 1:]
        return jnp.concatenate([per, lin], axis=-1)

    pos_age = t2v(age.astype(jnp.float32), jnp.cos,
                  params["w_age_full"], params["b_age_full"])
    tok = tok + params["alpha_age"][0, 0] * pos_age
    pos_abs = t2v(position.astype(jnp.float32), jnp.sin,
                  params["w_abs_full"], params["b_abs_full"])
    tok = tok + params["alpha_abs"][0, 0] * pos_abs
    tok = tok + params["ptype_table"][partner_type]
    return tok


if __name__ == "__main__":
    B, S, H, V = 2, 26, 32, 16
    key = jax.random.PRNGKey(0)
    k_par, k_tok, k_age, k_pos, k_pt, k_a1, k_a2 = jax.random.split(key, 7)

    params = make_params(k_par, V, H)
    tokens = jax.random.randint(k_tok, (B, S), 0, V, dtype=jnp.int32)
    age = jax.random.randint(k_age, (B, S), 0, 90, dtype=jnp.int32)
    position = jax.random.randint(k_pos, (B, S), 0, 365, dtype=jnp.int32)
    partner_type = jax.random.randint(k_pt, (B, S), 0, 3, dtype=jnp.int32)

    # tile_n=16 -> multi-tile grid + tail padding exercised at small shapes.
    # Case 1: module init (ReZero alphas = 0) -> exercises the epilogue-skip path.
    out0, _ = embeddings_forward(tokens, position, age, partner_type, params,
                                 tile_n=16)
    out0 = jax.block_until_ready(out0)
    ref0 = reference_forward(tokens, position, age, partner_type, params)
    assert out0.shape == (B, S, H)
    assert jnp.allclose(out0, ref0, atol=1e-5, rtol=1e-5), "mismatch (alpha=0)"

    # Case 2: non-zero alphas -> exercises the Time2Vec / ReZero path.
    params["alpha_age"] = 0.5 * jax.random.normal(k_a1, (1, 1), jnp.float32)
    params["alpha_abs"] = 0.5 * jax.random.normal(k_a2, (1, 1), jnp.float32)
    out1, _ = embeddings_forward(tokens, position, age, partner_type, params,
                                 tile_n=16)
    out1 = jax.block_until_ready(out1)
    ref1 = reference_forward(tokens, position, age, partner_type, params)
    assert jnp.allclose(out1, ref1, atol=1e-5, rtol=1e-5), "mismatch (alpha!=0)"

    print("KERNEL_OK")
</pallas_src>

<mosaic_0001>
module attributes {stable_mosaic.version = 11 : i64} {
  func.func @embeddings_kernel(%arg0: i32, %arg1: memref<16x2xi32, #tpu.memory_space<vmem>>, %arg2: memref<16x2xf32, #tpu.memory_space<vmem>>, %arg3: memref<16x32xf32, #tpu.memory_space<vmem>>, %arg4: memref<8x32xf32, #tpu.memory_space<vmem>>, %arg5: memref<8x32xf32, #tpu.memory_space<vmem>>, %arg6: memref<2xf32, #tpu.memory_space<smem>>, %arg7: memref<1xi32, #tpu.memory_space<smem>>, %arg8: memref<16x32xf32, #tpu.memory_space<vmem>>) attributes {dimension_semantics = [#tpu.dimension_semantics<parallel>], iteration_bounds = array<i64: 4>, scalar_prefetch = 0 : i64, scratch_operands = 0 : i64, tpu.core_type = #tpu.core_type<tc>, window_params = [{transform_indices = @transform_0, window_bounds = array<i64: 16, 2>}, {transform_indices = @transform_1, window_bounds = array<i64: 16, 2>}, {pipeline_mode = #tpu.pipeline_mode<synchronous>, transform_indices = @transform_2, window_bounds = array<i64: 16, 32>}, {pipeline_mode = #tpu.pipeline_mode<synchronous>, transform_indices = @transform_3, window_bounds = array<i64: 8, 32>}, {pipeline_mode = #tpu.pipeline_mode<synchronous>, transform_indices = @transform_4, window_bounds = array<i64: 8, 32>}, {transform_indices = @transform_5, window_bounds = array<i64: 2>}, {transform_indices = @transform_6, window_bounds = array<i64: 1>}, {transform_indices = @transform_7, window_bounds = array<i64: 16, 32>}]} {
    %c0 = arith.constant 0 : index
    %c0_0 = arith.constant 0 : index
    %0 = vector.load %arg1[%c0, %c0_0] : memref<16x2xi32, #tpu.memory_space<vmem>>, vector<16x2xi32>
    %1 = vector.extract_strided_slice %0 {offsets = [0, 1], sizes = [16, 1], strides = [1, 1]} : vector<16x2xi32> to vector<16x1xi32>
    %c0_1 = arith.constant 0 : index
    %c0_2 = arith.constant 0 : index
    %2 = vector.load %arg3[%c0_1, %c0_2] : memref<16x32xf32, #tpu.memory_space<vmem>>, vector<16x32xf32>
    %3 = vector.extract_strided_slice %0 {offsets = [0, 0], sizes = [16, 1], strides = [1, 1]} : vector<16x2xi32> to vector<16x1xi32>
    %4 = tpu.iota {dimensions = array<i32: 1>} : vector<16x16xi32>
    %5 = vector.broadcast %3 : vector<16x1xi32> to vector<16x16xi32>
    %6 = arith.cmpi eq, %5, %4 : vector<16x16xi32>
    %7 = arith.extui %6 : vector<16x16xi1> to vector<16x16xi32>
    %8 = arith.sitofp %7 : vector<16x16xi32> to vector<16x16xf32>
    %cst = arith.constant dense<0.000000e+00> : vector<16x32xf32>
    %9 = tpu.matmul %8, %2, %cst {dimension_numbers = #tpu.dot_dimension_numbers<[1], [0], [0], [1], [0, 0, 1, 1], [], []>, precision = #tpu.contract_precision<fp32>} : vector<16x16xf32>, vector<16x32xf32>, vector<16x32xf32> -> vector<16x32xf32>
    %c0_3 = arith.constant 0 : index
    %c0_4 = arith.constant 0 : index
    %10 = vector.load %arg4[%c0_3, %c0_4] : memref<8x32xf32, #tpu.memory_space<vmem>>, vector<1x32xf32>
    %c1 = arith.constant 1 : index
    %c0_5 = arith.constant 0 : index
    %11 = vector.load %arg4[%c1, %c0_5] : memref<8x32xf32, #tpu.memory_space<vmem>>, vector<1x32xf32>
    %c2 = arith.constant 2 : index
    %c0_6 = arith.constant 0 : index
    %12 = vector.load %arg4[%c2, %c0_6] : memref<8x32xf32, #tpu.memory_space<vmem>>, vector<1x32xf32>
    %c0_i32 = arith.constant 0 : i32
    %13 = vector.broadcast %c0_i32 : i32 to vector<16x1xi32>
    %14 = arith.cmpi eq, %1, %13 : vector<16x1xi32>
    %c1_i32 = arith.constant 1 : i32
    %15 = vector.broadcast %c1_i32 : i32 to vector<16x1xi32>
    %16 = arith.cmpi eq, %1, %15 : vector<16x1xi32>
    %17 = vector.shape_cast %16 : vector<16x1xi1> to vector<16x1xi1>
    %18 = vector.broadcast %17 : vector<16x1xi1> to vector<16x32xi1>
    %19 = vector.shape_cast %11 : vector<1x32xf32> to vector<1x32xf32>
    %20 = vector.broadcast %19 : vector<1x32xf32> to vector<16x32xf32>
    %21 = vector.shape_cast %12 : vector<1x32xf32> to vector<1x32xf32>
    %22 = vector.broadcast %21 : vector<1x32xf32> to vector<16x32xf32>
    %23 = arith.select %18, %20, %22 : vector<16x32xi1>, vector<16x32xf32>
    %24 = vector.shape_cast %14 : vector<16x1xi1> to vector<16x1xi1>
    %25 = vector.broadcast %24 : vector<16x1xi1> to vector<16x32xi1>
    %26 = vector.shape_cast %10 : vector<1x32xf32> to vector<1x32xf32>
    %27 = vector.broadcast %26 : vector<1x32xf32> to vector<16x32xf32>
    %28 = arith.select %25, %27, %23 : vector<16x32xi1>, vector<16x32xf32>
    %c0_7 = arith.constant 0 : index
    %29 = memref.load %arg6[%c0_7] : memref<2xf32, #tpu.memory_space<smem>>
    %c1_8 = arith.constant 1 : index
    %30 = memref.load %arg6[%c1_8] : memref<2xf32, #tpu.memory_space<smem>>
    %c0_9 = arith.constant 0 : index
    %31 = memref.load %arg7[%c0_9] : memref<1xi32, #tpu.memory_space<smem>>
    %c0_i32_10 = arith.constant 0 : i32
    %32 = arith.cmpi ne, %31, %c0_i32_10 : i32
    %33 = arith.extui %32 : i1 to i32
    %c0_i32_11 = arith.constant 0 : i32
    %34 = arith.cmpi ne, %33, %c0_i32_11 : i32
    scf.if %34 {
      %39 = tpu.iota {dimensions = array<i32: 1>} : vector<1x32xi32>
      %c31_i32 = arith.constant 31 : i32
      %40 = vector.broadcast %c31_i32 : i32 to vector<1x32xi32>
      %41 = arith.cmpi slt, %39, %40 : vector<1x32xi32>
      %c0_15 = arith.constant 0 : index
      %c0_16 = arith.constant 0 : index
      %42 = vector.load %arg2[%c0_15, %c0_16] : memref<16x2xf32, #tpu.memory_space<vmem>>, vector<16x1xf32>
      %c0_17 = arith.constant 0 : index
      %c1_18 = arith.constant 1 : index
      %43 = vector.load %arg2[%c0_17, %c1_18] : memref<16x2xf32, #tpu.memory_space<vmem>>, vector<16x1xf32>
      %c0_19 = arith.constant 0 : index
      %c0_20 = arith.constant 0 : index
      %44 = vector.load %arg5[%c0_19, %c0_20] : memref<8x32xf32, #tpu.memory_space<vmem>>, vector<1x32xf32>
      %c1_21 = arith.constant 1 : index
      %c0_22 = arith.constant 0 : index
      %45 = vector.load %arg5[%c1_21, %c0_22] : memref<8x32xf32, #tpu.memory_space<vmem>>, vector<1x32xf32>
      %c2_23 = arith.constant 2 : index
      %c0_24 = arith.constant 0 : index
      %46 = vector.load %arg5[%c2_23, %c0_24] : memref<8x32xf32, #tpu.memory_space<vmem>>, vector<1x32xf32>
      %c3 = arith.constant 3 : index
      %c0_25 = arith.constant 0 : index
      %47 = vector.load %arg5[%c3, %c0_25] : memref<8x32xf32, #tpu.memory_space<vmem>>, vector<1x32xf32>
      %48 = vector.broadcast %42 : vector<16x1xf32> to vector<16x32xf32>
      %49 = vector.broadcast %44 : vector<1x32xf32> to vector<16x32xf32>
      %50 = arith.mulf %48, %49 : vector<16x32xf32>
      %51 = vector.broadcast %45 : vector<1x32xf32> to vector<16x32xf32>
      %52 = arith.addf %50, %51 : vector<16x32xf32>
      %53 = math.cos %52 : vector<16x32xf32>
      %54 = vector.shape_cast %41 : vector<1x32xi1> to vector<1x32xi1>
      %55 = vector.broadcast %54 : vector<1x32xi1> to vector<16x32xi1>
      %56 = arith.select %55, %53, %52 : vector<16x32xi1>, vector<16x32xf32>
      %57 = vector.broadcast %43 : vector<16x1xf32> to vector<16x32xf32>
      %58 = vector.broadcast %46 : vector<1x32xf32> to vector<16x32xf32>
      %59 = arith.mulf %57, %58 : vector<16x32xf32>
      %60 = vector.broadcast %47 : vector<1x32xf32> to vector<16x32xf32>
      %61 = arith.addf %59, %60 : vector<16x32xf32>
      %62 = math.sin %61 : vector<16x32xf32>
      %63 = vector.shape_cast %41 : vector<1x32xi1> to vector<1x32xi1>
      %64 = vector.broadcast %63 : vector<1x32xi1> to vector<16x32xi1>
      %65 = arith.select %64, %62, %61 : vector<16x32xi1>, vector<16x32xf32>
      %66 = vector.broadcast %29 : f32 to vector<16x32xf32>
      %67 = arith.mulf %66, %56 : vector<16x32xf32>
      %68 = arith.addf %9, %67 : vector<16x32xf32>
      %69 = vector.broadcast %30 : f32 to vector<16x32xf32>
      %70 = arith.mulf %69, %65 : vector<16x32xf32>
      %71 = arith.addf %68, %70 : vector<16x32xf32>
      %72 = arith.addf %71, %28 : vector<16x32xf32>
      %c0_26 = arith.constant 0 : index
      %c0_27 = arith.constant 0 : index
      %73 = vector.load %arg8[%c0_26, %c0_27] : memref<16x32xf32, #tpu.memory_space<vmem>>, vector<16x32xf32>
      tpu.vector_store %arg8[%c0_26, %c0_27], %72 {strides = array<i32>} : memref<16x32xf32, #tpu.memory_space<vmem>>, vector<16x32xf32>,
    } else {
    }
    %c0_12 = arith.constant 0 : index
    %35 = memref.load %arg7[%c0_12] : memref<1xi32, #tpu.memory_space<smem>>
    %c0_i32_13 = arith.constant 0 : i32
    %36 = arith.cmpi eq, %35, %c0_i32_13 : i32
    %37 = arith.extui %36 : i1 to i32
    %c0_i32_14 = arith.constant 0 : i32
    %38 = arith.cmpi ne, %37, %c0_i32_14 : i32
    scf.if %38 {
      %39 = arith.addf %9, %28 : vector<16x32xf32>
      %c0_15 = arith.constant 0 : index
      %c0_16 = arith.constant 0 : index
      %40 = vector.load %arg8[%c0_15, %c0_16] : memref<16x32xf32, #tpu.memory_space<vmem>>, vector<16x32xf32>
      tpu.vector_store %arg8[%c0_15, %c0_16], %39 {strides = array<i32>} : memref<16x32xf32, #tpu.memory_space<vmem>>, vector<16x32xf32>,
    } else {
    }
    return
  }
  func.func @transform_0(%arg0: i32) -> (i32, i32) {
    %c0_i32 = arith.constant 0 : i32
    %c0_i32_0 = arith.constant 0 : i32
    return %arg0, %c0_i32 : i32, i32
  }
  func.func @transform_1(%arg0: i32) -> (i32, i32) {
    %c0_i32 = arith.constant 0 : i32
    %c0_i32_0 = arith.constant 0 : i32
    return %arg0, %c0_i32 : i32, i32
  }
  func.func @transform_2(%arg0: i32) -> (i32, i32) {
    %c0_i32 = arith.constant 0 : i32
    %c0_i32_0 = arith.constant 0 : i32
    %c0_i32_1 = arith.constant 0 : i32
    return %c0_i32, %c0_i32_0 : i32, i32
  }
  func.func @transform_3(%arg0: i32) -> (i32, i32) {
    %c0_i32 = arith.constant 0 : i32
    %c0_i32_0 = arith.constant 0 : i32
    %c0_i32_1 = arith.constant 0 : i32
    return %c0_i32, %c0_i32_0 : i32, i32
  }
  func.func @transform_4(%arg0: i32) -> (i32, i32) {
    %c0_i32 = arith.constant 0 : i32
    %c0_i32_0 = arith.constant 0 : i32
    %c0_i32_1 = arith.constant 0 : i32
    return %c0_i32, %c0_i32_0 : i32, i32
  }
  func.func @transform_5(%arg0: i32) -> i32 {
    %c0_i32 = arith.constant 0 : i32
    %c0_i32_0 = arith.constant 0 : i32
    return %c0_i32 : i32
  }
  func.func @transform_6(%arg0: i32) -> i32 {
    %c0_i32 = arith.constant 0 : i32
    %c0_i32_0 = arith.constant 0 : i32
    return %c0_i32 : i32
  }
  func.func @transform_7(%arg0: i32) -> (i32, i32) {
    %c0_i32 = arith.constant 0 : i32
    %c0_i32_0 = arith.constant 0 : i32
    return %arg0, %c0_i32 : i32, i32
  }
}

</mosaic_0001>

<llo_original>
// kernel: tpu_custom_call.1
$region0: #{tpu_custom_call.1}
  #allocation0 [shape = 'u32[]', space=smem, size = 0x4, offset = 0x4, fixed_abs, tag = 'smem constant byte address 0x4 - core index']
  #allocation1 [shape = 'u32[144,128]{1,0:T(1,128)}', space=vmem, size = 0x12000, scoped, tag = 'internal scratch']
  #allocation2 [shape = 's32[1]{0:T(128)S(6)}', space=smem, size = 0x200, scoped, tag = 'scoped memory for tpu_custom_call.1']
  %s0 = inlined_call_operand.vmem [shape: s32[64,2], index: 0, kind: input, shape index: {}]
  %s1 = inlined_call_operand.vmem [shape: f32[64,2], index: 1, kind: input, shape index: {}]
  %s2 = inlined_call_operand.vmem [shape: f32[16,32], index: 2, kind: input, shape index: {}]
  %s3 = inlined_call_operand.vmem [shape: f32[8,32], index: 3, kind: input, shape index: {}]
  %s4 = inlined_call_operand.vmem [shape: f32[8,32], index: 4, kind: input, shape index: {}]
  %s5 = inlined_call_operand.vmem [shape: f32[2], index: 5, kind: input, shape index: {}]
  %s6 = inlined_call_operand.<no memory space> [shape: s32[1], index: 6, kind: input, shape index: {}]
  %s7 = inlined_call_operand.vmem [shape: f32[64,32], index: 7, kind: output, shape index: {}]
  %s8 = sld [smem:[#allocation0]]
  $region73: #{tpu_custom_call.1} parent=0
    _
  %s10 = ssub.s32 1, %s8
  %s11 = scalar_select 0, %s10, %s8
  %12 = sst [smem:[#allocation2]] %s6
  $region1: #{tpu_custom_call.1} parent=0
    #allocation3 [shape = 'u8[512]{0}', space=smem, size = 0x200, scoped, tag = 'input window, operand 5, single buffered']
    #allocation4 [shape = 's32[2]{0}', space=sflag, size = 0x8, scoped, tag = 'scoped memory for tpu_custom_call.1']
    %13 = vsyncpa [#allocation4], 0
    loop: start=0, step=1, limit=6
    $region2: #{tpu_custom_call.1} parent=1 // loop_pre_header
      _
    $region3: #{tpu_custom_call.1} parent=1 // loop_header
      %s15 = sphi 0, %s19
      %p16 = scmp.ge.s32.totalorder %s15, 6
      %s25 = sphi 0, %s27
      %s28 = sphi 0, %s25
      %s29 = sphi 0, %s28
      %s45 = sphi 0, %s29
      %s51 = sphi 0, %s53
      %s54 = sphi 0, %s51
      %s55 = sphi 0, %s54
      %s71 = sphi 0, %s55
      %s75 = sphi 0, %s75
      %s77 = sphi 0, %s75
      %s78 = sphi 0, %s77
      %s92 = sphi 0, %s78
      %s96 = sphi 0, %s96
      %s98 = sphi 0, %s96
      %s99 = sphi 0, %s98
      %s113 = sphi 0, %s99
      %s117 = sphi 0, %s117
      %s119 = sphi 0, %s117
      %s120 = sphi 0, %s119
      %s134 = sphi 0, %s120
      %s138 = sphi 0, %s138
      %s140 = sphi 0, %s138
      %s141 = sphi 0, %s140
      %s155 = sphi 0, %s141
      %s159 = sphi 0, %s159
      %s161 = sphi 0, %s159
      %s162 = sphi 0, %s161
      %s176 = sphi 0, %s162
      %s182 = sphi 0, %s184
      %s185 = sphi 0, %s182
      %s186 = sphi 0, %s185
      %s202 = sphi 0, %s186
    $region4: #{tpu_custom_call.1} parent=1 // loop_header_branch
      %18 = sbr.rel (%p16) target = $region8
    $region5: #{tpu_custom_call.1} parent=1 // loop_body
      %s20 = ssub.s32 %s15, 1
      %s21 = ssub.s32 %s15, 2
      %s22 = sadd.s32 %s15, 1
      %s23 = ssub.s32 %s15, %s22
      %p24 = scmp.eq.s32.totalorder %s23, 0
      %s26 = sadd.s32 %s25, 1
      %s27 = scalar_select %p24, %s25, %s26
      %p30 = pneg %p24
      %p31 = scmp.eq.s32.totalorder %s15, 3
      %p32 = por %p30, %p31
      %p33 = scmp.ne.s32.totalorder %s25, %s28
      %p34 = scmp.eq.s32.totalorder %s15, 0
      %p35 = por %p33, %p34
      %p36 = scmp.ne.s32.totalorder %s25, %s28
      %p37 = scmp.eq.s32.totalorder %s20, 3
      %p38 = por %p36, %p37
      %p39 = scmp.ne.s32.totalorder %s28, %s29
      %p40 = scmp.eq.s32.totalorder %s20, 0
      %p41 = por %p39, %p40
      %p42 = scmp.ne.s32.totalorder %s28, %s29
      %p43 = scmp.eq.s32.totalorder %s21, 3
      %p44 = por %p42, %p43
      %p46 = scmp.ne.s32.totalorder %s29, %s45
      %p47 = scmp.eq.s32.totalorder %s21, 0
      %p48 = por %p46, %p47
      %s49 = ssub.s32 %s15, %s22
      %p50 = scmp.eq.s32.totalorder %s49, 0
      %s52 = sadd.s32 %s51, 1
      %s53 = scalar_select %p50, %s51, %s52
      %p56 = pneg %p50
      %p57 = scmp.eq.s32.totalorder %s15, 3
      %p58 = por %p56, %p57
      %p59 = scmp.ne.s32.totalorder %s51, %s54
      %p60 = scmp.eq.s32.totalorder %s15, 0
      %p61 = por %p59, %p60
      %p62 = scmp.ne.s32.totalorder %s51, %s54
      %p63 = scmp.eq.s32.totalorder %s20, 3
      %p64 = por %p62, %p63
      %p65 = scmp.ne.s32.totalorder %s54, %s55
      %p66 = scmp.eq.s32.totalorder %s20, 0
      %p67 = por %p65, %p66
      %p68 = scmp.ne.s32.totalorder %s54, %s55
      %p69 = scmp.eq.s32.totalorder %s21, 3
      %p70 = por %p68, %p69
      %p72 = scmp.ne.s32.totalorder %s55, %s71
      %p73 = scmp.eq.s32.totalorder %s21, 0
      %p74 = por %p72, %p73
      %s76 = sadd.s32 %s75, 1
      %p79 = scmp.eq.s32.totalorder %s15, 3
      %p80 = scmp.ne.s32.totalorder %s75, %s77
      %p81 = scmp.eq.s32.totalorder %s15, 0
      %p82 = por %p80, %p81
      %p83 = scmp.ne.s32.totalorder %s75, %s77
      %p84 = scmp.eq.s32.totalorder %s20, 3
      %p85 = por %p83, %p84
      %p86 = scmp.ne.s32.totalorder %s77, %s78
      %p87 = scmp.eq.s32.totalorder %s20, 0
      %p88 = por %p86, %p87
      %p89 = scmp.ne.s32.totalorder %s77, %s78
      %p90 = scmp.eq.s32.totalorder %s21, 3
      %p91 = por %p89, %p90
      %p93 = scmp.ne.s32.totalorder %s78, %s92
      %p94 = scmp.eq.s32.totalorder %s21, 0
      %p95 = por %p93, %p94
      %s97 = sadd.s32 %s96, 1
      %p100 = scmp.eq.s32.totalorder %s15, 3
      %p101 = scmp.ne.s32.totalorder %s96, %s98
      %p102 = scmp.eq.s32.totalorder %s15, 0
      %p103 = por %p101, %p102
      %p104 = scmp.ne.s32.totalorder %s96, %s98
      %p105 = scmp.eq.s32.totalorder %s20, 3
      %p106 = por %p104, %p105
      %p107 = scmp.ne.s32.totalorder %s98, %s99
      %p108 = scmp.eq.s32.totalorder %s20, 0
      %p109 = por %p107, %p108
      %p110 = scmp.ne.s32.totalorder %s98, %s99
      %p111 = scmp.eq.s32.totalorder %s21, 3
      %p112 = por %p110, %p111
      %p114 = scmp.ne.s32.totalorder %s99, %s113
      %p115 = scmp.eq.s32.totalorder %s21, 0
      %p116 = por %p114, %p115
      %s118 = sadd.s32 %s117, 1
      %p121 = scmp.eq.s32.totalorder %s15, 3
      %p122 = scmp.ne.s32.totalorder %s117, %s119
      %p123 = scmp.eq.s32.totalorder %s15, 0
      %p124 = por %p122, %p123
      %p125 = scmp.ne.s32.totalorder %s117, %s119
      %p126 = scmp.eq.s32.totalorder %s20, 3
      %p127 = por %p125, %p126
      %p128 = scmp.ne.s32.totalorder %s119, %s120
      %p129 = scmp.eq.s32.totalorder %s20, 0
      %p130 = por %p128, %p129
      %p131 = scmp.ne.s32.totalorder %s119, %s120
      %p132 = scmp.eq.s32.totalorder %s21, 3
      %p133 = por %p131, %p132
      %p135 = scmp.ne.s32.totalorder %s120, %s134
      %p136 = scmp.eq.s32.totalorder %s21, 0
      %p137 = por %p135, %p136
      %s139 = sadd.s32 %s138, 1
      %p142 = scmp.eq.s32.totalorder %s15, 3
      %p143 = scmp.ne.s32.totalorder %s138, %s140
      %p144 = scmp.eq.s32.totalorder %s15, 0
      %p145 = por %p143, %p144
      %p146 = scmp.ne.s32.totalorder %s138, %s140
      %p147 = scmp.eq.s32.totalorder %s20, 3
      %p148 = por %p146, %p147
      %p149 = scmp.ne.s32.totalorder %s140, %s141
      %p150 = scmp.eq.s32.totalorder %s20, 0
      %p151 = por %p149, %p150
      %p152 = scmp.ne.s32.totalorder %s140, %s141
      %p153 = scmp.eq.s32.totalorder %s21, 3
      %p154 = por %p152, %p153
      %p156 = scmp.ne.s32.totalorder %s141, %s155
      %p157 = scmp.eq.s32.totalorder %s21, 0
      %p158 = por %p156, %p157
      %s160 = sadd.s32 %s159, 1
      %p163 = scmp.eq.s32.totalorder %s15, 3
      %p164 = scmp.ne.s32.totalorder %s159, %s161
      %p165 = scmp.eq.s32.totalorder %s15, 0
      %p166 = por %p164, %p165
      %p167 = scmp.ne.s32.totalorder %s159, %s161
      %p168 = scmp.eq.s32.totalorder %s20, 3
      %p169 = por %p167, %p168
      %p170 = scmp.ne.s32.totalorder %s161, %s162
      %p171 = scmp.eq.s32.totalorder %s20, 0
      %p172 = por %p170, %p171
      %p173 = scmp.ne.s32.totalorder %s161, %s162
      %p174 = scmp.eq.s32.totalorder %s21, 3
      %p175 = por %p173, %p174
      %p177 = scmp.ne.s32.totalorder %s162, %s176
      %p178 = scmp.eq.s32.totalorder %s21, 0
      %p179 = por %p177, %p178
      %s180 = ssub.s32 %s15, %s22
      %p181 = scmp.eq.s32.totalorder %s180, 0
      %s183 = sadd.s32 %s182, 1
      %s184 = scalar_select %p181, %s182, %s183
      %p187 = pneg %p181
      %p188 = scmp.eq.s32.totalorder %s15, 3
      %p189 = por %p187, %p188
      %p190 = scmp.ne.s32.totalorder %s182, %s185
      %p191 = scmp.eq.s32.totalorder %s15, 0
      %p192 = por %p190, %p191
      %p193 = scmp.ne.s32.totalorder %s182, %s185
      %p194 = scmp.eq.s32.totalorder %s20, 3
      %p195 = por %p193, %p194
      %p196 = scmp.ne.s32.totalorder %s185, %s186
      %p197 = scmp.eq.s32.totalorder %s20, 0
      %p198 = por %p196, %p197
      %p199 = scmp.ne.s32.totalorder %s185, %s186
      %p200 = scmp.eq.s32.totalorder %s21, 3
      %p201 = por %p199, %p200
      %p203 = scmp.ne.s32.totalorder %s186, %s202
      %p204 = scmp.eq.s32.totalorder %s21, 0
      %p205 = por %p203, %p204
      %p206 = scmp.le.s32.totalorder 1, %s15
      %p207 = scmp.lt.s32.totalorder %s15, 5
      %p208 = pnand %p206, %p207
      %p209 = pneg %p208
      // Predicated region
      $region9: #{tpu_custom_call.1} parent=5 // pred_check
        _
      $region10: #{tpu_custom_call.1} parent=5 // pred_check_branch
        %211 = sbr.rel (%p208) target = $region12
      $region11: #{tpu_custom_call.1} parent=5 // pred_region
        %s212 = ssub.s32 %s15, 1
        // Predicated region
        $region13: #{tpu_custom_call.1} parent=11 // pred_check
          %p213 = pneg %p88
        $region14: #{tpu_custom_call.1} parent=11 // pred_check_branch
          %215 = sbr.rel (%p213) target = $region16
        $region15: #{tpu_custom_call.1} parent=11 // pred_region
          _
        $region16: #{tpu_custom_call.1} parent=11 // pred_fallthru
          _
        // Predicated region
        $region17: #{tpu_custom_call.1} parent=11 // pred_check
          %p216 = pneg %p109
        $region18: #{tpu_custom_call.1} parent=11 // pred_check_branch
          %218 = sbr.rel (%p216) target = $region20
        $region19: #{tpu_custom_call.1} parent=11 // pred_region
          _
        $region20: #{tpu_custom_call.1} parent=11 // pred_fallthru
          _
        // Predicated region
        $region21: #{tpu_custom_call.1} parent=11 // pred_check
          %p219 = pneg %p130
        $region22: #{tpu_custom_call.1} parent=11 // pred_check_branch
          %221 = sbr.rel (%p219) target = $region24
        $region23: #{tpu_custom_call.1} parent=11 // pred_region
          _
        $region24: #{tpu_custom_call.1} parent=11 // pred_fallthru
          _
        // Predicated region
        $region25: #{tpu_custom_call.1} parent=11 // pred_check
          %p222 = pneg %p151
        $region26: #{tpu_custom_call.1} parent=11 // pred_check_branch
          %224 = sbr.rel (%p222) target = $region28
        $region27: #{tpu_custom_call.1} parent=11 // pred_region
          %s226 = ssub.s32 16, 16
          %227 = vsyncadd [#allocation4], %s226
          %s229 = sshll.u32 %s5, 4
          %s230 = int_to_ptr.vmem [resolvable:$true] %s229
          %232 = dma.vmem_to_smem %s230, 16, [#allocation3], [#allocation4]
        $region28: #{tpu_custom_call.1} parent=11 // pred_fallthru
          _
        // Predicated region
        $region29: #{tpu_custom_call.1} parent=11 // pred_check
          %p233 = pneg %p172
        $region30: #{tpu_custom_call.1} parent=11 // pred_check_branch
          %235 = sbr.rel (%p233) target = $region32
        $region31: #{tpu_custom_call.1} parent=11 // pred_region
          _
        $region32: #{tpu_custom_call.1} parent=11 // pred_fallthru
          _
      $region12: #{tpu_custom_call.1} parent=5 // pred_fallthru
        _
      %p236 = scmp.lt.s32.totalorder %s15, 4
      // Predicated region
      $region33: #{tpu_custom_call.1} parent=5 // pred_check
        %p237 = pneg %p236
      $region34: #{tpu_custom_call.1} parent=5 // pred_check_branch
        %239 = sbr.rel (%p237) target = $region36
      $region35: #{tpu_custom_call.1} parent=5 // pred_region
        // Predicated region
        $region37: #{tpu_custom_call.1} parent=35 // pred_check
          %p240 = pneg %p35
        $region38: #{tpu_custom_call.1} parent=35 // pred_check_branch
          %242 = sbr.rel (%p240) target = $region40
        $region39: #{tpu_custom_call.1} parent=35 // pred_region
          %s243 = smul.u32 2, %s15
          %p244 = scmp.lt.s32.totalorder %s243, 7
          %s245 = scalar_select %p244, %s243, 7
          %s246 = smul.addr %s245, 8
          %s247 = scalar_lea.vmem %s0, %s246
          %s248 = smul.u32 2, %s15
        $region40: #{tpu_custom_call.1} parent=35 // pred_fallthru
          _
        // Predicated region
        $region41: #{tpu_custom_call.1} parent=35 // pred_check
          %p249 = pneg %p61
        $region42: #{tpu_custom_call.1} parent=35 // pred_check_branch
          %251 = sbr.rel (%p249) target = $region44
        $region43: #{tpu_custom_call.1} parent=35 // pred_region
          %s252 = smul.u32 2, %s15
          %p253 = scmp.lt.s32.totalorder %s252, 7
          %s254 = scalar_select %p253, %s252, 7
          %s255 = smul.addr %s254, 8
          %s256 = scalar_lea.vmem %s1, %s255
          %s257 = smul.u32 2, %s15
        $region44: #{tpu_custom_call.1} parent=35 // pred_fallthru
          _
      $region36: #{tpu_custom_call.1} parent=5 // pred_fallthru
        _
      %p258 = scmp.le.s32.totalorder 1, %s15
      %p259 = scmp.lt.s32.totalorder %s15, 5
      %p260 = pnand %p258, %p259
      %p261 = pneg %p260
      // Predicated region
      $region45: #{tpu_custom_call.1} parent=5 // pred_check
        _
      $region46: #{tpu_custom_call.1} parent=5 // pred_check_branch
        %263 = sbr.rel (%p260) target = $region48
      $region47: #{tpu_custom_call.1} parent=5 // pred_region
        %s264 = ssub.s32 %s15, 1
        // Predicated region
        $region49: #{tpu_custom_call.1} parent=47 // pred_check
          %p265 = pneg %p151
        $region50: #{tpu_custom_call.1} parent=47 // pred_check_branch
          %267 = sbr.rel (%p265) target = $region52
        $region51: #{tpu_custom_call.1} parent=47 // pred_region
          %268 = dma.done [#allocation4], 16
        $region52: #{tpu_custom_call.1} parent=47 // pred_fallthru
          _
        %269 = sfence
        %s270 = smul.u32 2, %s20
        %p271 = scmp.lt.s32.totalorder %s270, 7
        %s272 = scalar_select %p271, %s270, 7
        %s273 = smul.addr %s272, 8
        %s274 = scalar_lea.vmem %s0, %s273
        %p275 = pneg %p41
        %p276 = pneg %p38
        %s277 = smul.u32 2, %s20
        %p278 = scmp.lt.s32.totalorder %s277, 7
        %s279 = scalar_select %p278, %s277, 7
        %s280 = smul.addr %s279, 8
        %s281 = scalar_lea.vmem %s1, %s280
        %p282 = pneg %p67
        %p283 = pneg %p64
        %p284 = pneg %p88
        %p285 = pneg %p85
        %p286 = pneg %p109
        %p287 = pneg %p106
        %p288 = pneg %p130
        %p289 = pneg %p127
        %p290 = pneg %p151
        %p291 = pneg %p148
        %p292 = pneg %p172
        %p293 = pneg %p169
        %p294 = pneg %p198
        %p295 = pneg %p195
        %s296 = smul.u32 2, %s20
        %p297 = scmp.lt.s32.totalorder %s296, 7
        %s298 = scalar_select %p297, %s296, 7
        %s299 = smul.addr %s298, 8
        %s300 = scalar_lea.vmem %s7, %s299
        %s301 = smul.u32 2, %s20
        %p302 = scmp.lt.s32.totalorder %s301, 7
        %s303 = scalar_select %p302, %s301, 7
        %s304 = smul.addr %s303, 8
        %s305 = scalar_lea.vmem %s0, %s304
        %s306 = smul.u32 2, %s20
        %s307 = smul.u32 2, %s20
        %p308 = scmp.lt.s32.totalorder %s307, 7
        %s309 = scalar_select %p308, %s307, 7
        %s310 = smul.addr %s309, 8
        %s311 = scalar_lea.vmem %s1, %s310
        %s312 = smul.u32 2, %s20
        %s313 = smul.u32 2, %s20
        %p314 = scmp.lt.s32.totalorder %s313, 7
        %s315 = scalar_select %p314, %s313, 7
        %s316 = smul.addr %s315, 8
        %s317 = scalar_lea.vmem %s7, %s316
        %s318 = smul.u32 2, %s20
        %v319 = vld [vmem:[%s305] sm:$0xff]
        %v320 = vld [vmem:[%s305 + $0x8] sm:$0xff]
        %v321 = vld [vmem:[%s2] sm:$0xff]
        %v322 = vld [vmem:[%s2 + $0x8] sm:$0xff]
        %v323 = vlaneseq
        %v324 = vand.u32 %v323, 127
        %325 = vset.pattern.permute.xlu0 0
        %326 = vperm.xlu0 %325, %v319
        %v327 = vpop.permute.xlu0 %326
        %328 = vset.pattern.permute.xlu0 0
        %329 = vperm.xlu0 %328, %v320
        %v330 = vpop.permute.xlu0 %329
        %vm331 = vcmp.eq.s32.totalorder %v327, %v324
        %vm332 = vcmp.eq.s32.totalorder %v330, %v324
        %v333 = vsel %vm331, 1, 0
        %v334 = vsel %vm332, 1, 0
        %v335 = vcvt.s32.f32 %v333
        %v336 = vcvt.s32.f32 %v334
        %vm337 = vcmask 130048
        %v339 = vsel %vm337, %v335, 0
        %v342 = vsel %vm337, %v336, 0
        %344 = vmatprep.subr.mxu0 0.0
        %v345 = vand.u32 %v321, 4294901760
        %346 = vmatpush1.msra.mxu0 %v345
        %347 = vmatprep.subr.mxu0 0.0
        %v348 = vand.u32 %v322, 4294901760
        %349 = vmatpush1.msra.mxu0 %v348
        %350 = vmatprep.subr.mxu0 0.0
        %351 = vmatpush1.msra.mxu0 0.0
        %352 = vmatprep.subr.mxu0 0.0
        %353 = vmatpush1.msra.mxu0 0.0
        %354 = vmatprep.subr.mxu0 0.0
        %355 = vmatpush1.msra.mxu0 0.0
        %356 = vmatprep.subr.mxu0 0.0
        %357 = vmatpush1.msra.mxu0 0.0
        %358 = vmatprep.subr.mxu0 0.0
        %359 = vmatpush1.msra.mxu0 0.0
        %360 = vmatprep.subr.mxu0 0.0
        %361 = vmatpush1.msra.mxu0 0.0
        %362 = vmatprep.subr.mxu0 0.0
        %363 = vmatpush1.msra.mxu0 0.0
        %364 = vmatprep.subr.mxu0 0.0
        %365 = vmatpush1.msra.mxu0 0.0
        %366 = vmatprep.subr.mxu0 0.0
        %367 = vmatpush1.msra.mxu0 0.0
        %368 = vmatprep.subr.mxu0 0.0
        %369 = vmatpush1.msra.mxu0 0.0
        %370 = vmatprep.subr.mxu0 0.0
        %371 = vmatpush1.msra.mxu0 0.0
        %372 = vmatprep.subr.mxu0 0.0
        %373 = vmatpush1.msra.mxu0 0.0
        %374 = vmatprep.subr.mxu0 0.0
        %375 = vmatpush1.msra.mxu0 0.0
        %376 = vmatprep.subr.mxu0 0.0
        %377 = vmatpush1.msra.mxu0 0.0
        %378 = vmatprep.subr.mxu0 0.0
        %379 = vmatpush1.msra.mxu0 0.0
        %380 = vmatprep.subr.mxu0 0.0
        %381 = vmatpush1.msra.mxu0 0.0
        %382 = vmatprep.subr.mxu0 0.0
        %383 = vmatpush1.msra.mxu0 0.0
        %384 = vmatprep.subr.mxu0 0.0
        %385 = vmatpush1.msra.mxu0 0.0
        %386 = vmatprep.subr.mxu0 0.0
        %387 = vmatpush1.msra.mxu0 0.0
        %388 = vmatprep.subr.mxu0 0.0
        %389 = vmatpush1.msra.mxu0 0.0
        %390 = vmatprep.subr.mxu0 0.0
        %391 = vmatpush1.msra.mxu0 0.0
        %392 = vmatprep.subr.mxu0 0.0
        %393 = vmatpush1.msra.mxu0 0.0
        %394 = vmatprep.subr.mxu0 0.0
        %395 = vmatpush1.msra.mxu0 0.0
        %396 = vmatprep.subr.mxu0 0.0
        %397 = vmatpush1.msra.mxu0 0.0
        %398 = vmatprep.subr.mxu0 0.0
        %399 = vmatpush1.msra.mxu0 0.0
        %400 = vmatprep.subr.mxu0 0.0
        %401 = vmatpush1.msra.mxu0 0.0
        %402 = vmatprep.subr.mxu0 0.0
        %403 = vmatpush1.msra.mxu0 0.0
        %404 = vmatprep.subr.mxu0 0.0
        %405 = vmatpush1.msra.mxu0 0.0
        %406 = vmatprep.subr.mxu0 0.0
        %407 = vmatpush1.msra.mxu0 0.0
        %408 = vmatprep.subr.mxu0 0.0
        %409 = vmatpush1.msra.mxu0 0.0
        %410 = vmatprep.mubr.f32.mxu0 0.0
        %v411 = vand.u32 %v339, 4294901760
        %v412 = vsub.f32 %v339, %v411
        %v413 = vand.u32 %v412, 4294901760
        %v414 = vsub.f32 %v412, %v413
        %v415 = vand.u32 %v414, 4294901760
        %416 = vmatmul.mubr.f32.gmra.mrb[0].mxu0 %v415
        %v417 = vpop.f32.mrb[0].mxu0
        %v418 = vadd.f32 0.0, %v417
        %v419 = vpop.f32.mrb[0].mxu0
        %420 = vmatprep.mubr.f32.mxu0 0.0
        %v421 = vand.u32 %v342, 4294901760
        %v422 = vsub.f32 %v342, %v421
        %v423 = vand.u32 %v422, 4294901760
        %v424 = vsub.f32 %v422, %v423
        %v425 = vand.u32 %v424, 4294901760
        %426 = vmatmul.mubr.f32.gmra.mrb[0].mxu0 %v425
        %v427 = vpop.f32.mrb[0].mxu0
        %v428 = vadd.f32 0.0, %v427
        %v429 = vpop.f32.mrb[0].mxu0
        %430 = vdwg.mxu0
        %431 = vmatprep.subr.mxu0 0.0
        %v432 = vand.u32 %v321, 4294901760
        %v433 = vsub.f32 %v321, %v432
        %v434 = vand.u32 %v433, 4294901760
        %v435 = vsub.f32 %v433, %v434
        %v436 = vand.u32 %v435, 4294901760
        %437 = vmatpush1.msra.mxu0 %v436
        %438 = vmatprep.subr.mxu0 0.0
        %v439 = vand.u32 %v322, 4294901760
        %v440 = vsub.f32 %v322, %v439
        %v441 = vand.u32 %v440, 4294901760
        %v442 = vsub.f32 %v440, %v441
        %v443 = vand.u32 %v442, 4294901760
        %444 = vmatpush1.msra.mxu0 %v443
        %445 = vmatprep.subr.mxu0 0.0
        %446 = vmatpush1.msra.mxu0 0.0
        %447 = vmatprep.subr.mxu0 0.0
        %448 = vmatpush1.msra.mxu0 0.0
        %449 = vmatprep.subr.mxu0 0.0
        %450 = vmatpush1.msra.mxu0 0.0
        %451 = vmatprep.subr.mxu0 0.0
        %452 = vmatpush1.msra.mxu0 0.0
        %453 = vmatprep.subr.mxu0 0.0
        %454 = vmatpush1.msra.mxu0 0.0
        %455 = vmatprep.subr.mxu0 0.0
        %456 = vmatpush1.msra.mxu0 0.0
        %457 = vmatprep.subr.mxu0 0.0
        %458 = vmatpush1.msra.mxu0 0.0
        %459 = vmatprep.subr.mxu0 0.0
        %460 = vmatpush1.msra.mxu0 0.0
        %461 = vmatprep.subr.mxu0 0.0
        %462 = vmatpush1.msra.mxu0 0.0
        %463 = vmatprep.subr.mxu0 0.0
        %464 = vmatpush1.msra.mxu0 0.0
        %465 = vmatprep.subr.mxu0 0.0
        %466 = vmatpush1.msra.mxu0 0.0
        %467 = vmatprep.subr.mxu0 0.0
        %468 = vmatpush1.msra.mxu0 0.0
        %469 = vmatprep.subr.mxu0 0.0
        %470 = vmatpush1.msra.mxu0 0.0
        %471 = vmatprep.subr.mxu0 0.0
        %472 = vmatpush1.msra.mxu0 0.0
        %473 = vmatprep.subr.mxu0 0.0
        %474 = vmatpush1.msra.mxu0 0.0
        %475 = vmatprep.subr.mxu0 0.0
        %476 = vmatpush1.msra.mxu0 0.0
        %477 = vmatprep.subr.mxu0 0.0
        %478 = vmatpush1.msra.mxu0 0.0
        %479 = vmatprep.subr.mxu0 0.0
        %480 = vmatpush1.msra.mxu0 0.0
        %481 = vmatprep.subr.mxu0 0.0
        %482 = vmatpush1.msra.mxu0 0.0
        %483 = vmatprep.subr.mxu0 0.0
        %484 = vmatpush1.msra.mxu0 0.0
        %485 = vmatprep.subr.mxu0 0.0
        %486 = vmatpush1.msra.mxu0 0.0
        %487 = vmatprep.subr.mxu0 0.0
        %488 = vmatpush1.msra.mxu0 0.0
        %489 = vmatprep.subr.mxu0 0.0
        %490 = vmatpush1.msra.mxu0 0.0
        %491 = vmatprep.subr.mxu0 0.0
        %492 = vmatpush1.msra.mxu0 0.0
        %493 = vmatprep.subr.mxu0 0.0
        %494 = vmatpush1.msra.mxu0 0.0
        %495 = vmatprep.subr.mxu0 0.0
        %496 = vmatpush1.msra.mxu0 0.0
        %497 = vmatprep.subr.mxu0 0.0
        %498 = vmatpush1.msra.mxu0 0.0
        %499 = vmatprep.subr.mxu0 0.0
        %500 = vmatpush1.msra.mxu0 0.0
        %501 = vmatprep.subr.mxu0 0.0
        %502 = vmatpush1.msra.mxu0 0.0
        %503 = vmatprep.subr.mxu0 0.0
        %504 = vmatpush1.msra.mxu0 0.0
        %505 = vmatprep.mubr.f32.mxu0 0.0
        %v506 = vand.u32 %v339, 4294901760
        %507 = vmatmul.mubr.f32.gmra.mrb[0].mxu0 %v506
        %v508 = vpop.f32.mrb[0].mxu0
        %v509 = vadd.f32 %v418, %v508
        %v510 = vpop.f32.mrb[0].mxu0
        %511 = vmatprep.mubr.f32.mxu0 0.0
        %v512 = vand.u32 %v342, 4294901760
        %513 = vmatmul.mubr.f32.gmra.mrb[0].mxu0 %v512
        %v514 = vpop.f32.mrb[0].mxu0
        %v515 = vadd.f32 %v428, %v514
        %v516 = vpop.f32.mrb[0].mxu0
        %517 = vdwg.mxu0
        %518 = vmatprep.subr.mxu0 0.0
        %v519 = vand.u32 %v321, 4294901760
        %v520 = vsub.f32 %v321, %v519
        %521 = vmatpush1.msra.mxu0 %v520
        %522 = vmatprep.subr.mxu0 0.0
        %v523 = vand.u32 %v322, 4294901760
        %v524 = vsub.f32 %v322, %v523
        %525 = vmatpush1.msra.mxu0 %v524
        %526 = vmatprep.subr.mxu0 0.0
        %527 = vmatpush1.msra.mxu0 0.0
        %528 = vmatprep.subr.mxu0 0.0
        %529 = vmatpush1.msra.mxu0 0.0
        %530 = vmatprep.subr.mxu0 0.0
        %531 = vmatpush1.msra.mxu0 0.0
        %532 = vmatprep.subr.mxu0 0.0
        %533 = vmatpush1.msra.mxu0 0.0
        %534 = vmatprep.subr.mxu0 0.0
        %535 = vmatpush1.msra.mxu0 0.0
        %536 = vmatprep.subr.mxu0 0.0
        %537 = vmatpush1.msra.mxu0 0.0
        %538 = vmatprep.subr.mxu0 0.0
        %539 = vmatpush1.msra.mxu0 0.0
        %540 = vmatprep.subr.mxu0 0.0
        %541 = vmatpush1.msra.mxu0 0.0
        %542 = vmatprep.subr.mxu0 0.0
        %543 = vmatpush1.msra.mxu0 0.0
        %544 = vmatprep.subr.mxu0 0.0
        %545 = vmatpush1.msra.mxu0 0.0
        %546 = vmatprep.subr.mxu0 0.0
        %547 = vmatpush1.msra.mxu0 0.0
        %548 = vmatprep.subr.mxu0 0.0
        %549 = vmatpush1.msra.mxu0 0.0
        %550 = vmatprep.subr.mxu0 0.0
        %551 = vmatpush1.msra.mxu0 0.0
        %552 = vmatprep.subr.mxu0 0.0
        %553 = vmatpush1.msra.mxu0 0.0
        %554 = vmatprep.subr.mxu0 0.0
        %555 = vmatpush1.msra.mxu0 0.0
        %556 = vmatprep.subr.mxu0 0.0
        %557 = vmatpush1.msra.mxu0 0.0
        %558 = vmatprep.subr.mxu0 0.0
        %559 = vmatpush1.msra.mxu0 0.0
        %560 = vmatprep.subr.mxu0 0.0
        %561 = vmatpush1.msra.mxu0 0.0
        %562 = vmatprep.subr.mxu0 0.0
        %563 = vmatpush1.msra.mxu0 0.0
        %564 = vmatprep.subr.mxu0 0.0
        %565 = vmatpush1.msra.mxu0 0.0
        %566 = vmatprep.subr.mxu0 0.0
        %567 = vmatpush1.msra.mxu0 0.0
        %568 = vmatprep.subr.mxu0 0.0
        %569 = vmatpush1.msra.mxu0 0.0
        %570 = vmatprep.subr.mxu0 0.0
        %571 = vmatpush1.msra.mxu0 0.0
        %572 = vmatprep.subr.mxu0 0.0
        %573 = vmatpush1.msra.mxu0 0.0
        %574 = vmatprep.subr.mxu0 0.0
        %575 = vmatpush1.msra.mxu0 0.0
        %576 = vmatprep.subr.mxu0 0.0
        %577 = vmatpush1.msra.mxu0 0.0
        %578 = vmatprep.subr.mxu0 0.0
        %579 = vmatpush1.msra.mxu0 0.0
        %580 = vmatprep.subr.mxu0 0.0
        %581 = vmatpush1.msra.mxu0 0.0
        %582 = vmatprep.subr.mxu0 0.0
        %583 = vmatpush1.msra.mxu0 0.0
        %584 = vmatprep.subr.mxu0 0.0
        %585 = vmatpush1.msra.mxu0 0.0
        %586 = vmatprep.mubr.f32.mxu0 0.0
        %v587 = vand.u32 %v339, 4294901760
        %v588 = vsub.f32 %v339, %v587
        %589 = vmatmul.mubr.f32.gmra.mrb[0].mxu0 %v588
        %v590 = vpop.f32.mrb[0].mxu0
        %v591 = vadd.f32 %v509, %v590
        %v592 = vpop.f32.mrb[0].mxu0
        %593 = vmatprep.mubr.f32.mxu0 0.0
        %v594 = vand.u32 %v342, 4294901760
        %v595 = vsub.f32 %v342, %v594
        %596 = vmatmul.mubr.f32.gmra.mrb[0].mxu0 %v595
        %v597 = vpop.f32.mrb[0].mxu0
        %v598 = vadd.f32 %v515, %v597
        %v599 = vpop.f32.mrb[0].mxu0
        %600 = vdwg.mxu0
        %601 = vmatprep.subr.mxu0 0.0
        %v602 = vand.u32 %v321, 4294901760
        %603 = vmatpush1.msra.mxu0 %v602
        %604 = vmatprep.subr.mxu0 0.0
        %v605 = vand.u32 %v322, 4294901760
        %606 = vmatpush1.msra.mxu0 %v605
        %607 = vmatprep.subr.mxu0 0.0
        %608 = vmatpush1.msra.mxu0 0.0
        %609 = vmatprep.subr.mxu0 0.0
        %610 = vmatpush1.msra.mxu0 0.0
        %611 = vmatprep.subr.mxu0 0.0
        %612 = vmatpush1.msra.mxu0 0.0
        %613 = vmatprep.subr.mxu0 0.0
        %614 = vmatpush1.msra.mxu0 0.0
        %615 = vmatprep.subr.mxu0 0.0
        %616 = vmatpush1.msra.mxu0 0.0
        %617 = vmatprep.subr.mxu0 0.0
        %618 = vmatpush1.msra.mxu0 0.0
        %619 = vmatprep.subr.mxu0 0.0
        %620 = vmatpush1.msra.mxu0 0.0
        %621 = vmatprep.subr.mxu0 0.0
        %622 = vmatpush1.msra.mxu0 0.0
        %623 = vmatprep.subr.mxu0 0.0
        %624 = vmatpush1.msra.mxu0 0.0
        %625 = vmatprep.subr.mxu0 0.0
        %626 = vmatpush1.msra.mxu0 0.0
        %627 = vmatprep.subr.mxu0 0.0
        %628 = vmatpush1.msra.mxu0 0.0
        %629 = vmatprep.subr.mxu0 0.0
        %630 = vmatpush1.msra.mxu0 0.0
        %631 = vmatprep.subr.mxu0 0.0
        %632 = vmatpush1.msra.mxu0 0.0
        %633 = vmatprep.subr.mxu0 0.0
        %634 = vmatpush1.msra.mxu0 0.0
        %635 = vmatprep.subr.mxu0 0.0
        %636 = vmatpush1.msra.mxu0 0.0
        %637 = vmatprep.subr.mxu0 0.0
        %638 = vmatpush1.msra.mxu0 0.0
        %639 = vmatprep.subr.mxu0 0.0
        %640 = vmatpush1.msra.mxu0 0.0
        %641 = vmatprep.subr.mxu0 0.0
        %642 = vmatpush1.msra.mxu0 0.0
        %643 = vmatprep.subr.mxu0 0.0
        %644 = vmatpush1.msra.mxu0 0.0
        %645 = vmatprep.subr.mxu0 0.0
        %646 = vmatpush1.msra.mxu0 0.0
        %647 = vmatprep.subr.mxu0 0.0
        %648 = vmatpush1.msra.mxu0 0.0
        %649 = vmatprep.subr.mxu0 0.0
        %650 = vmatpush1.msra.mxu0 0.0
        %651 = vmatprep.subr.mxu0 0.0
        %652 = vmatpush1.msra.mxu0 0.0
        %653 = vmatprep.subr.mxu0 0.0
        %654 = vmatpush1.msra.mxu0 0.0
        %655 = vmatprep.subr.mxu0 0.0
        %656 = vmatpush1.msra.mxu0 0.0
        %657 = vmatprep.subr.mxu0 0.0
        %658 = vmatpush1.msra.mxu0 0.0
        %659 = vmatprep.subr.mxu0 0.0
        %660 = vmatpush1.msra.mxu0 0.0
        %661 = vmatprep.subr.mxu0 0.0
        %662 = vmatpush1.msra.mxu0 0.0
        %663 = vmatprep.subr.mxu0 0.0
        %664 = vmatpush1.msra.mxu0 0.0
        %665 = vmatprep.subr.mxu0 0.0
        %666 = vmatpush1.msra.mxu0 0.0
        %667 = vmatprep.mubr.f32.mxu0 0.0
        %v668 = vand.u32 %v339, 4294901760
        %v669 = vsub.f32 %v339, %v668
        %v670 = vand.u32 %v669, 4294901760
        %671 = vmatmul.mubr.f32.gmra.mrb[0].mxu0 %v670
        %v672 = vpop.f32.mrb[0].mxu0
        %v673 = vadd.f32 %v591, %v672
        %v674 = vpop.f32.mrb[0].mxu0
        %675 = vmatprep.mubr.f32.mxu0 0.0
        %v676 = vand.u32 %v342, 4294901760
        %v677 = vsub.f32 %v342, %v676
        %v678 = vand.u32 %v677, 4294901760
        %679 = vmatmul.mubr.f32.gmra.mrb[0].mxu0 %v678
        %v680 = vpop.f32.mrb[0].mxu0
        %v681 = vadd.f32 %v598, %v680
        %v682 = vpop.f32.mrb[0].mxu0
        %683 = vdwg.mxu0
        %684 = vmatprep.subr.mxu0 0.0
        %v685 = vand.u32 %v321, 4294901760
        %v686 = vsub.f32 %v321, %v685
        %v687 = vand.u32 %v686, 4294901760
        %688 = vmatpush1.msra.mxu0 %v687
        %689 = vmatprep.subr.mxu0 0.0
        %v690 = vand.u32 %v322, 4294901760
        %v691 = vsub.f32 %v322, %v690
        %v692 = vand.u32 %v691, 4294901760
        %693 = vmatpush1.msra.mxu0 %v692
        %694 = vmatprep.subr.mxu0 0.0
        %695 = vmatpush1.msra.mxu0 0.0
        %696 = vmatprep.subr.mxu0 0.0
        %697 = vmatpush1.msra.mxu0 0.0
        %698 = vmatprep.subr.mxu0 0.0
        %699 = vmatpush1.msra.mxu0 0.0
        %700 = vmatprep.subr.mxu0 0.0
        %701 = vmatpush1.msra.mxu0 0.0
        %702 = vmatprep.subr.mxu0 0.0
        %703 = vmatpush1.msra.mxu0 0.0
        %704 = vmatprep.subr.mxu0 0.0
        %705 = vmatpush1.msra.mxu0 0.0
        %706 = vmatprep.subr.mxu0 0.0
        %707 = vmatpush1.msra.mxu0 0.0
        %708 = vmatprep.subr.mxu0 0.0
        %709 = vmatpush1.msra.mxu0 0.0
        %710 = vmatprep.subr.mxu0 0.0
        %711 = vmatpush1.msra.mxu0 0.0
        %712 = vmatprep.subr.mxu0 0.0
        %713 = vmatpush1.msra.mxu0 0.0
        %714 = vmatprep.subr.mxu0 0.0
        %715 = vmatpush1.msra.mxu0 0.0
        %716 = vmatprep.subr.mxu0 0.0
        %717 = vmatpush1.msra.mxu0 0.0
        %718 = vmatprep.subr.mxu0 0.0
        %719 = vmatpush1.msra.mxu0 0.0
        %720 = vmatprep.subr.mxu0 0.0
        %721 = vmatpush1.msra.mxu0 0.0
        %722 = vmatprep.subr.mxu0 0.0
        %723 = vmatpush1.msra.mxu0 0.0
        %724 = vmatprep.subr.mxu0 0.0
        %725 = vmatpush1.msra.mxu0 0.0
        %726 = vmatprep.subr.mxu0 0.0
        %727 = vmatpush1.msra.mxu0 0.0
        %728 = vmatprep.subr.mxu0 0.0
        %729 = vmatpush1.msra.mxu0 0.0
        %730 = vmatprep.subr.mxu0 0.0
        %731 = vmatpush1.msra.mxu0 0.0
        %732 = vmatprep.subr.mxu0 0.0
        %733 = vmatpush1.msra.mxu0 0.0
        %734 = vmatprep.subr.mxu0 0.0
        %735 = vmatpush1.msra.mxu0 0.0
        %736 = vmatprep.subr.mxu0 0.0
        %737 = vmatpush1.msra.mxu0 0.0
        %738 = vmatprep.subr.mxu0 0.0
        %739 = vmatpush1.msra.mxu0 0.0
        %740 = vmatprep.subr.mxu0 0.0
        %741 = vmatpush1.msra.mxu0 0.0
        %742 = vmatprep.subr.mxu0 0.0
        %743 = vmatpush1.msra.mxu0 0.0
        %744 = vmatprep.subr.mxu0 0.0
        %745 = vmatpush1.msra.mxu0 0.0
        %746 = vmatprep.subr.mxu0 0.0
        %747 = vmatpush1.msra.mxu0 0.0
        %748 = vmatprep.subr.mxu0 0.0
        %749 = vmatpush1.msra.mxu0 0.0
        %750 = vmatprep.subr.mxu0 0.0
        %751 = vmatpush1.msra.mxu0 0.0
        %752 = vmatprep.subr.mxu0 0.0
        %753 = vmatpush1.msra.mxu0 0.0
        %754 = vmatprep.mubr.f32.mxu0 0.0
        %v755 = vand.u32 %v339, 4294901760
        %756 = vmatmul.mubr.f32.gmra.mrb[0].mxu0 %v755
        %v757 = vpop.f32.mrb[0].mxu0
        %v758 = vadd.f32 %v673, %v757
        %v759 = vpop.f32.mrb[0].mxu0
        %760 = vmatprep.mubr.f32.mxu0 0.0
        %v761 = vand.u32 %v342, 4294901760
        %762 = vmatmul.mubr.f32.gmra.mrb[0].mxu0 %v761
        %v763 = vpop.f32.mrb[0].mxu0
        %v764 = vadd.f32 %v681, %v763
        %v765 = vpop.f32.mrb[0].mxu0
        %766 = vdwg.mxu0
        %767 = vmatprep.subr.mxu0 0.0
        %v768 = vand.u32 %v321, 4294901760
        %769 = vmatpush1.msra.mxu0 %v768
        %770 = vmatprep.subr.mxu0 0.0
        %v771 = vand.u32 %v322, 4294901760
        %772 = vmatpush1.msra.mxu0 %v771
        %773 = vmatprep.subr.mxu0 0.0
        %774 = vmatpush1.msra.mxu0 0.0
        %775 = vmatprep.subr.mxu0 0.0
        %776 = vmatpush1.msra.mxu0 0.0
        %777 = vmatprep.subr.mxu0 0.0
        %778 = vmatpush1.msra.mxu0 0.0
        %779 = vmatprep.subr.mxu0 0.0
        %780 = vmatpush1.msra.mxu0 0.0
        %781 = vmatprep.subr.mxu0 0.0
        %782 = vmatpush1.msra.mxu0 0.0
        %783 = vmatprep.subr.mxu0 0.0
        %784 = vmatpush1.msra.mxu0 0.0
        %785 = vmatprep.subr.mxu0 0.0
        %786 = vmatpush1.msra.mxu0 0.0
        %787 = vmatprep.subr.mxu0 0.0
        %788 = vmatpush1.msra.mxu0 0.0
        %789 = vmatprep.subr.mxu0 0.0
        %790 = vmatpush1.msra.mxu0 0.0
        %791 = vmatprep.subr.mxu0 0.0
        %792 = vmatpush1.msra.mxu0 0.0
        %793 = vmatprep.subr.mxu0 0.0
        %794 = vmatpush1.msra.mxu0 0.0
        %795 = vmatprep.subr.mxu0 0.0
        %796 = vmatpush1.msra.mxu0 0.0
        %797 = vmatprep.subr.mxu0 0.0
        %798 = vmatpush1.msra.mxu0 0.0
        %799 = vmatprep.subr.mxu0 0.0
        %800 = vmatpush1.msra.mxu0 0.0
        %801 = vmatprep.subr.mxu0 0.0
        %802 = vmatpush1.msra.mxu0 0.0
        %803 = vmatprep.subr.mxu0 0.0
        %804 = vmatpush1.msra.mxu0 0.0
        %805 = vmatprep.subr.mxu0 0.0
        %806 = vmatpush1.msra.mxu0 0.0
        %807 = vmatprep.subr.mxu0 0.0
        %808 = vmatpush1.msra.mxu0 0.0
        %809 = vmatprep.subr.mxu0 0.0
        %810 = vmatpush1.msra.mxu0 0.0
        %811 = vmatprep.subr.mxu0 0.0
        %812 = vmatpush1.msra.mxu0 0.0
        %813 = vmatprep.subr.mxu0 0.0
        %814 = vmatpush1.msra.mxu0 0.0
        %815 = vmatprep.subr.mxu0 0.0
        %816 = vmatpush1.msra.mxu0 0.0
        %817 = vmatprep.subr.mxu0 0.0
        %818 = vmatpush1.msra.mxu0 0.0
        %819 = vmatprep.subr.mxu0 0.0
        %820 = vmatpush1.msra.mxu0 0.0
        %821 = vmatprep.subr.mxu0 0.0
        %822 = vmatpush1.msra.mxu0 0.0
        %823 = vmatprep.subr.mxu0 0.0
        %824 = vmatpush1.msra.mxu0 0.0
        %825 = vmatprep.subr.mxu0 0.0
        %826 = vmatpush1.msra.mxu0 0.0
        %827 = vmatprep.subr.mxu0 0.0
        %828 = vmatpush1.msra.mxu0 0.0
        %829 = vmatprep.subr.mxu0 0.0
        %830 = vmatpush1.msra.mxu0 0.0
        %831 = vmatprep.subr.mxu0 0.0
        %832 = vmatpush1.msra.mxu0 0.0
        %833 = vmatprep.mubr.f32.mxu0 0.0
        %v834 = vand.u32 %v339, 4294901760
        %835 = vmatmul.mubr.f32.gmra.mrb[0].mxu0 %v834
        %v836 = vpop.f32.mrb[0].mxu0
        %v837 = vadd.f32 %v758, %v836
        %v838 = vpop.f32.mrb[0].mxu0
        %839 = vmatprep.mubr.f32.mxu0 0.0
        %v840 = vand.u32 %v342, 4294901760
        %841 = vmatmul.mubr.f32.gmra.mrb[0].mxu0 %v840
        %v842 = vpop.f32.mrb[0].mxu0
        %v843 = vadd.f32 %v764, %v842
        %v844 = vpop.f32.mrb[0].mxu0
        %845 = vdwg.mxu0
        %v846 = vld [vmem:[%s3] sm:$0x1]
        %v847 = vld [vmem:[%s3 + $0x1] sm:$0x1]
        %v848 = vld [vmem:[%s3 + $0x2] sm:$0x1]
        %vm849 = vcmp.eq.s32.totalorder %v319, 0
        %vm850 = vcmp.eq.s32.totalorder %v320, 0
        %vm851 = vcmp.eq.s32.totalorder %v319, 1
        %vm852 = vcmp.eq.s32.totalorder %v320, 1
        %v853 = vsel %vm851, 1, 0
        %v854 = vsel %vm852, 1, 0
        %855 = vset.pattern.permute.xlu0 1
        %856 = vperm.xlu0 %855, %v853
        %v857 = vpop.permute.xlu0 %856
        %858 = vset.pattern.permute.xlu0 1
        %859 = vperm.xlu0 %858, %v854
        %v860 = vpop.permute.xlu0 %859
        %vm861 = vcmp.eq.s32.totalorder %v857, 1
        %vm862 = vcmp.eq.s32.totalorder %v860, 1
        %v863 = vlaneseq
        %v864 = vshrl.u32 %v863, 7
        %v865 = vsub.s32 0, %v864
        %v866 = vrot.slane %v847, %v865
        %v867 = vlaneseq
        %v868 = vshrl.u32 %v867, 7
        %v869 = vsub.s32 0, %v868
        %v870 = vrot.slane %v848, %v869
        %v871 = vsel %vm861, %v866, %v870
        %v872 = vsel %vm862, %v866, %v870
        %v873 = vsel %vm849, 1, 0
        %v874 = vsel %vm850, 1, 0
        %875 = vset.pattern.permute.xlu0 1
        %876 = vperm.xlu0 %875, %v873
        %v877 = vpop.permute.xlu0 %876
        %878 = vset.pattern.permute.xlu0 1
        %879 = vperm.xlu0 %878, %v874
        %v880 = vpop.permute.xlu0 %879
        %vm881 = vcmp.eq.s32.totalorder %v877, 1
        %vm882 = vcmp.eq.s32.totalorder %v880, 1
        %v883 = vlaneseq
        %v884 = vshrl.u32 %v883, 7
        %v885 = vsub.s32 0, %v884
        %v886 = vrot.slane %v846, %v885
        %v887 = vsel %vm881, %v886, %v871
        %v888 = vsel %vm882, %v886, %v872
        %s889 = sld [smem:[#allocation3]]
        %s890 = sld [smem:[#allocation3 + $0x1]]
        %s891 = sld [smem:[#allocation2]]
        %p892 = scmp.ne.s32.totalorder %s891, 0
        // Predicated region
        $region53: #{tpu_custom_call.1} parent=47 // pred_check
          %p893 = pneg %p892
        $region54: #{tpu_custom_call.1} parent=47 // pred_check_branch
          %895 = sbr.rel (%p893) target = $region56
        $region55: #{tpu_custom_call.1} parent=47 // pred_region
          %vm896 = vcmp.lt.s32.totalorder %v324, 31
          %v897 = vld [vmem:[%s311] sm:$0xff]
          %v898 = vld [vmem:[%s311 + $0x8] sm:$0xff]
          %v899 = vld [vmem:[%s4] sm:$0x1]
          %v900 = vld [vmem:[%s4 + $0x1] sm:$0x1]
          %v901 = vld [vmem:[%s4 + $0x2] sm:$0x1]
          %v902 = vld [vmem:[%s4 + $0x3] sm:$0x1]
          %904 = vset.pattern.permute.xlu0 0
          %905 = vperm.xlu0 %904, %v897
          %v906 = vpop.permute.xlu0 %905
          %909 = vset.pattern.permute.xlu0 0
          %910 = vperm.xlu0 %909, %v898
          %v911 = vpop.permute.xlu0 %910
          %v913 = vlaneseq
          %v914 = vshrl.u32 %v913, 7
          %v915 = vsub.s32 0, %v914
          %v916 = vrot.slane %v899, %v915
          %v917 = vmul.f32 %v906, %v916
          %v918 = vmul.f32 %v911, %v916
          %v919 = vlaneseq
          %v920 = vshrl.u32 %v919, 7
          %v921 = vsub.s32 0, %v920
          %v922 = vrot.slane %v900, %v921
          %v923 = vadd.f32 %v917, %v922
          %v924 = vadd.f32 %v918, %v922
          %v925 = vand.u32 2147483647, %v923
          %vm926 = vcmp.le.f32.partialorder %v925, 0.7853982
          %vm927 = vcmp.lt.s32.totalorder %v923, 0
          %v928 = vand.u32 %v923, 2139095040
          %v929 = vshrl.u32 %v928, 23
          %v930 = vsub.s32 %v929, 127
          %v931 = vand.u32 2147483647, %v923
          %v932 = vand.u32 %v931, 8388607
          %v933 = vor.u32 %v932, 8388608
          %v934 = vsub.s32 0, %v933
          %v935 = vadd.s32 %v930, 1
          %vm936 = vcmp.gt.s32.totalorder %v935, 0
          %v937 = vsel %vm936, %v935, 0
          %v938 = vshrl.u32 %v937, 5
          %v939 = vand.u32 %v937, 31
          %v940 = vsub.s32 32, %v939
          %v941 = vshrl.u32 683565275, %v940
          %v942 = vshll.u32 683565275, %v939
          %v943 = vshrl.u32 2475754826, %v940
          %v944 = vor.u32 %v942, %v943
          %v945 = vshll.u32 2475754826, %v939
          %v946 = vshrl.u32 2131351028, %v940
          %v947 = vor.u32 %v945, %v946
          %v948 = vshll.u32 2131351028, %v939
          %v949 = vshrl.u32 2102212464, %v940
          %v950 = vor.u32 %v948, %v949
          %v951 = vshll.u32 2102212464, %v939
          %v952 = vshrl.u32 920167782, %v940
          %v953 = vor.u32 %v951, %v952
          %v954 = vshll.u32 920167782, %v939
          %v955 = vshrl.u32 1326507024, %v940
          %v956 = vor.u32 %v954, %v955
          %vm957 = vcmp.lt.s32.totalorder %v938, 1
          %vm958 = vcmp.lt.s32.totalorder %v938, 2
          %vm959 = vcmp.lt.s32.totalorder %v938, 3
          %vm960 = vcmp.lt.s32.totalorder %v938, 4
          %v961 = vsel %vm957, %v941, %v944
          %v962 = vsel %vm960, %v950, 2102212464
          %v963 = vsel %vm959, %v947, %v962
          %v964 = vsel %vm958, %v961, %v963
          %v965 = vsel %vm957, %v944, %v947
          %v966 = vsel %vm960, %v953, 920167782
          %v967 = vsel %vm959, %v950, %v966
          %v968 = vsel %vm958, %v965, %v967
          %v969 = vsel %vm957, %v947, %v950
          %v970 = vsel %vm960, %v956, 1326507024
          %v971 = vsel %vm959, %v953, %v970
          %v972 = vsel %vm958, %v969, %v971
          %v973 = vshll.u32 %v933, 8
          %v974 = vmul.u32.u64.compose %v973, %v972
          %v975 = vextract.low.u32 %v974
          %v976 = vextract.high.u32 %v974
          %v977 = vmul.u32.u64.compose %v973, %v968
          %v978 = vextract.low.u32 %v977
          %v979 = vextract.high.u32 %v977
          %v980 = vmul.u32 %v973, %v964
          %v981 = vadd.s32 %v976, %v978
          %vm982 = vc.u32 %v976, %v978
          %v983 = vadd.s32 %v979, 1
          %v984 = vsel %vm982, %v983, %v979
          %v985 = vadd.s32 %v980, %v984
          %v986 = vadd.s32 %v985, 536870912
          %v987 = vshrl.u32 %v986, 30
          %v988 = vshll.u32 %v987, 30
          %v989 = vsub.s32 %v985, %v988
          %vm990 = vcmp.lt.s32.totalorder %v989, 0
          %v991 = vsub.s32 0, %v989
          %v992 = vsel %vm990, %v991, %v989
          %v993 = vclz %v992
          %v994 = vsub.s32 %v993, 2
          %vm995 = vcmp.gt.s32.totalorder 0, %v994
          %v996 = vsel %vm995, 0, %v994
          %v997 = vsub.s32 32, %v996
          %v998 = vshll.u32 %v989, %v996
          %v999 = vshrl.u32 %v981, %v997
          %v1000 = vor.u32 %v998, %v999
          %v1001 = vsub.s32 4294967266, %v996
          %v1002 = vadd.s32 %v1001, 127
          %v1003 = vshll.u32 %v1002, 23
          %v1004 = vor.u32 4788187, %v1003
          %v1005 = vand.u32 2147483647, %v1004
          %v1007 = vcvt.s32.f32 %v1000
          %v1008 = vmul.f32 %v1007, %v1005
          %v1009 = vxor.u32 %v1008, 2147483648
          %v1010 = vsel %vm927, %v1009, %v1008
          %v1011 = vsub.s32 4, %v987
          %v1012 = vsel %vm927, %v1011, %v987
          %v1013 = vsel %vm926, %v923, %v1010
          %v1014 = vsel %vm926, 0, %v1012
          %v1015 = vcosq.f32.pop %v1013
          %v1016 = vsinq.f32.pop %v1013
          %vm1017 = vweird.f32 %v923
          %v1018 = vand.u32 %v1014, 3
          %vm1019 = vcmp.lt.s32.totalorder %v1018, 2
          %vm1020 = vcmp.eq.s32.totalorder %v1018, 0
          %v1021 = vxor.u32 %v1016, 2147483648
          %v1022 = vsel %vm1020, %v1015, %v1021
          %vm1023 = vcmp.eq.s32.totalorder %v1018, 2
          %v1024 = vxor.u32 %v1015, 2147483648
          %v1025 = vsel %vm1023, %v1024, %v1016
          %v1026 = vsel %vm1019, %v1022, %v1025
          %v1027 = vsel %vm1017, nan, %v1026
          %v1028 = vand.u32 2147483647, %v924
          %vm1029 = vcmp.le.f32.partialorder %v1028, 0.7853982
          %vm1030 = vcmp.lt.s32.totalorder %v924, 0
          %v1031 = vand.u32 %v924, 2139095040
          %v1032 = vshrl.u32 %v1031, 23
          %v1033 = vsub.s32 %v1032, 127
          %v1034 = vand.u32 2147483647, %v924
          %v1035 = vand.u32 %v1034, 8388607
          %v1036 = vor.u32 %v1035, 8388608
          %v1037 = vsub.s32 0, %v1036
          %v1038 = vadd.s32 %v1033, 1
          %vm1039 = vcmp.gt.s32.totalorder %v1038, 0
          %v1040 = vsel %vm1039, %v1038, 0
          %v1041 = vshrl.u32 %v1040, 5
          %v1042 = vand.u32 %v1040, 31
          %v1043 = vsub.s32 32, %v1042
          %v1044 = vshrl.u32 683565275, %v1043
          %v1045 = vshll.u32 683565275, %v1042
          %v1046 = vshrl.u32 2475754826, %v1043
          %v1047 = vor.u32 %v1045, %v1046
          %v1048 = vshll.u32 2475754826, %v1042
          %v1049 = vshrl.u32 2131351028, %v1043
          %v1050 = vor.u32 %v1048, %v1049
          %v1051 = vshll.u32 2131351028, %v1042
          %v1052 = vshrl.u32 2102212464, %v1043
          %v1053 = vor.u32 %v1051, %v1052
          %v1054 = vshll.u32 2102212464, %v1042
          %v1055 = vshrl.u32 920167782, %v1043
          %v1056 = vor.u32 %v1054, %v1055
          %v1057 = vshll.u32 920167782, %v1042
          %v1058 = vshrl.u32 1326507024, %v1043
          %v1059 = vor.u32 %v1057, %v1058
          %vm1060 = vcmp.lt.s32.totalorder %v1041, 1
          %vm1061 = vcmp.lt.s32.totalorder %v1041, 2
          %vm1062 = vcmp.lt.s32.totalorder %v1041, 3
          %vm1063 = vcmp.lt.s32.totalorder %v1041, 4
          %v1064 = vsel %vm1060, %v1044, %v1047
          %v1065 = vsel %vm1063, %v1053, 2102212464
          %v1066 = vsel %vm1062, %v1050, %v1065
          %v1067 = vsel %vm1061, %v1064, %v1066
          %v1068 = vsel %vm1060, %v1047, %v1050
          %v1069 = vsel %vm1063, %v1056, 920167782
          %v1070 = vsel %vm1062, %v1053, %v1069
          %v1071 = vsel %vm1061, %v1068, %v1070
          %v1072 = vsel %vm1060, %v1050, %v1053
          %v1073 = vsel %vm1063, %v1059, 1326507024
          %v1074 = vsel %vm1062, %v1056, %v1073
          %v1075 = vsel %vm1061, %v1072, %v1074
          %v1076 = vshll.u32 %v1036, 8
          %v1077 = vmul.u32.u64.compose %v1076, %v1075
          %v1078 = vextract.low.u32 %v1077
          %v1079 = vextract.high.u32 %v1077
          %v1080 = vmul.u32.u64.compose %v1076, %v1071
          %v1081 = vextract.low.u32 %v1080
          %v1082 = vextract.high.u32 %v1080
          %v1083 = vmul.u32 %v1076, %v1067
          %v1084 = vadd.s32 %v1079, %v1081
          %vm1085 = vc.u32 %v1079, %v1081
          %v1086 = vadd.s32 %v1082, 1
          %v1087 = vsel %vm1085, %v1086, %v1082
          %v1088 = vadd.s32 %v1083, %v1087
          %v1089 = vadd.s32 %v1088, 536870912
          %v1090 = vshrl.u32 %v1089, 30
          %v1091 = vshll.u32 %v1090, 30
          %v1092 = vsub.s32 %v1088, %v1091
          %vm1093 = vcmp.lt.s32.totalorder %v1092, 0
          %v1094 = vsub.s32 0, %v1092
          %v1095 = vsel %vm1093, %v1094, %v1092
          %v1096 = vclz %v1095
          %v1097 = vsub.s32 %v1096, 2
          %vm1098 = vcmp.gt.s32.totalorder 0, %v1097
          %v1099 = vsel %vm1098, 0, %v1097
          %v1100 = vsub.s32 32, %v1099
          %v1101 = vshll.u32 %v1092, %v1099
          %v1102 = vshrl.u32 %v1084, %v1100
          %v1103 = vor.u32 %v1101, %v1102
          %v1104 = vsub.s32 4294967266, %v1099
          %v1105 = vadd.s32 %v1104, 127
          %v1106 = vshll.u32 %v1105, 23
          %v1107 = vor.u32 4788187, %v1106
          %v1108 = vand.u32 2147483647, %v1107
          %v1110 = vcvt.s32.f32 %v1103
          %v1111 = vmul.f32 %v1110, %v1108
          %v1112 = vxor.u32 %v1111, 2147483648
          %v1113 = vsel %vm1030, %v1112, %v1111
          %v1114 = vsub.s32 4, %v1090
          %v1115 = vsel %vm1030, %v1114, %v1090
          %v1116 = vsel %vm1029, %v924, %v1113
          %v1117 = vsel %vm1029, 0, %v1115
          %v1118 = vcosq.f32.pop %v1116
          %v1119 = vsinq.f32.pop %v1116
          %vm1120 = vweird.f32 %v924
          %v1121 = vand.u32 %v1117, 3
          %vm1122 = vcmp.lt.s32.totalorder %v1121, 2
          %vm1123 = vcmp.eq.s32.totalorder %v1121, 0
          %v1124 = vxor.u32 %v1119, 2147483648
          %v1125 = vsel %vm1123, %v1118, %v1124
          %vm1126 = vcmp.eq.s32.totalorder %v1121, 2
          %v1127 = vxor.u32 %v1118, 2147483648
          %v1128 = vsel %vm1126, %v1127, %v1119
          %v1129 = vsel %vm1122, %v1125, %v1128
          %v1130 = vsel %vm1120, nan, %v1129
          %v1131 = vsel %vm896, 1, 0
          %vm1132 = vcmp.eq.s32.totalorder %v1131, 1
          %v1133 = vsel %vm1132, %v1027, %v923
          %v1134 = vsel %vm1132, %v1130, %v924
          %1135 = vset.pattern.permute.xlu0 1
          %1136 = vperm.xlu0 %1135, %v897
          %v1137 = vpop.permute.xlu0 %1136
          %1139 = vset.pattern.permute.xlu0 1
          %1140 = vperm.xlu0 %1139, %v898
          %v1141 = vpop.permute.xlu0 %1140
          %v1143 = vlaneseq
          %v1144 = vshrl.u32 %v1143, 7
          %v1145 = vsub.s32 0, %v1144
          %v1146 = vrot.slane %v901, %v1145
          %v1147 = vmul.f32 %v1137, %v1146
          %v1148 = vmul.f32 %v1141, %v1146
          %v1149 = vlaneseq
          %v1150 = vshrl.u32 %v1149, 7
          %v1151 = vsub.s32 0, %v1150
          %v1152 = vrot.slane %v902, %v1151
          %v1153 = vadd.f32 %v1147, %v1152
          %v1154 = vadd.f32 %v1148, %v1152
          %v1155 = vand.u32 2147483647, %v1153
          %vm1156 = vcmp.le.f32.partialorder %v1155, 0.7853982
          %vm1157 = vcmp.lt.s32.totalorder %v1153, 0
          %v1158 = vand.u32 %v1153, 2139095040
          %v1159 = vshrl.u32 %v1158, 23
          %v1160 = vsub.s32 %v1159, 127
          %v1161 = vand.u32 2147483647, %v1153
          %v1162 = vand.u32 %v1161, 8388607
          %v1163 = vor.u32 %v1162, 8388608
          %v1164 = vsub.s32 0, %v1163
          %v1165 = vadd.s32 %v1160, 1
          %vm1166 = vcmp.gt.s32.totalorder %v1165, 0
          %v1167 = vsel %vm1166, %v1165, 0
          %v1168 = vshrl.u32 %v1167, 5
          %v1169 = vand.u32 %v1167, 31
          %v1170 = vsub.s32 32, %v1169
          %v1171 = vshrl.u32 683565275, %v1170
          %v1172 = vshll.u32 683565275, %v1169
          %v1173 = vshrl.u32 2475754826, %v1170
          %v1174 = vor.u32 %v1172, %v1173
          %v1175 = vshll.u32 2475754826, %v1169
          %v1176 = vshrl.u32 2131351028, %v1170
          %v1177 = vor.u32 %v1175, %v1176
          %v1178 = vshll.u32 2131351028, %v1169
          %v1179 = vshrl.u32 2102212464, %v1170
          %v1180 = vor.u32 %v1178, %v1179
          %v1181 = vshll.u32 2102212464, %v1169
          %v1182 = vshrl.u32 920167782, %v1170
          %v1183 = vor.u32 %v1181, %v1182
          %v1184 = vshll.u32 920167782, %v1169
          %v1185 = vshrl.u32 1326507024, %v1170
          %v1186 = vor.u32 %v1184, %v1185
          %vm1187 = vcmp.lt.s32.totalorder %v1168, 1
          %vm1188 = vcmp.lt.s32.totalorder %v1168, 2
          %vm1189 = vcmp.lt.s32.totalorder %v1168, 3
          %vm1190 = vcmp.lt.s32.totalorder %v1168, 4
          %v1191 = vsel %vm1187, %v1171, %v1174
          %v1192 = vsel %vm1190, %v1180, 2102212464
          %v1193 = vsel %vm1189, %v1177, %v1192
          %v1194 = vsel %vm1188, %v1191, %v1193
          %v1195 = vsel %vm1187, %v1174, %v1177
          %v1196 = vsel %vm1190, %v1183, 920167782
          %v1197 = vsel %vm1189, %v1180, %v1196
          %v1198 = vsel %vm1188, %v1195, %v1197
          %v1199 = vsel %vm1187, %v1177, %v1180
          %v1200 = vsel %vm1190, %v1186, 1326507024
          %v1201 = vsel %vm1189, %v1183, %v1200
          %v1202 = vsel %vm1188, %v1199, %v1201
          %v1203 = vshll.u32 %v1163, 8
          %v1204 = vmul.u32.u64.compose %v1203, %v1202
          %v1205 = vextract.low.u32 %v1204
          %v1206 = vextract.high.u32 %v1204
          %v1207 = vmul.u32.u64.compose %v1203, %v1198
          %v1208 = vextract.low.u32 %v1207
          %v1209 = vextract.high.u32 %v1207
          %v1210 = vmul.u32 %v1203, %v1194
          %v1211 = vadd.s32 %v1206, %v1208
          %vm1212 = vc.u32 %v1206, %v1208
          %v1213 = vadd.s32 %v1209, 1
          %v1214 = vsel %vm1212, %v1213, %v1209
          %v1215 = vadd.s32 %v1210, %v1214
          %v1216 = vadd.s32 %v1215, 536870912
          %v1217 = vshrl.u32 %v1216, 30
          %v1218 = vshll.u32 %v1217, 30
          %v1219 = vsub.s32 %v1215, %v1218
          %vm1220 = vcmp.lt.s32.totalorder %v1219, 0
          %v1221 = vsub.s32 0, %v1219
          %v1222 = vsel %vm1220, %v1221, %v1219
          %v1223 = vclz %v1222
          %v1224 = vsub.s32 %v1223, 2
          %vm1225 = vcmp.gt.s32.totalorder 0, %v1224
          %v1226 = vsel %vm1225, 0, %v1224
          %v1227 = vsub.s32 32, %v1226
          %v1228 = vshll.u32 %v1219, %v1226
          %v1229 = vshrl.u32 %v1211, %v1227
          %v1230 = vor.u32 %v1228, %v1229
          %v1231 = vsub.s32 4294967266, %v1226
          %v1232 = vadd.s32 %v1231, 127
          %v1233 = vshll.u32 %v1232, 23
          %v1234 = vor.u32 4788187, %v1233
          %v1235 = vand.u32 2147483647, %v1234
          %v1237 = vcvt.s32.f32 %v1230
          %v1238 = vmul.f32 %v1237, %v1235
          %v1239 = vxor.u32 %v1238, 2147483648
          %v1240 = vsel %vm1157, %v1239, %v1238
          %v1241 = vsub.s32 4, %v1217
          %v1242 = vsel %vm1157, %v1241, %v1217
          %v1243 = vsel %vm1156, %v1153, %v1240
          %v1244 = vsel %vm1156, 0, %v1242
          %v1245 = vcosq.f32.pop %v1243
          %v1246 = vsinq.f32.pop %v1243
          %vm1247 = vweird.f32 %v1153
          %v1248 = vadd.s32 %v1244, 3
          %v1249 = vand.u32 %v1248, 3
          %vm1250 = vcmp.lt.s32.totalorder %v1249, 2
          %vm1251 = vcmp.eq.s32.totalorder %v1249, 0
          %v1252 = vxor.u32 %v1246, 2147483648
          %v1253 = vsel %vm1251, %v1245, %v1252
          %vm1254 = vcmp.eq.s32.totalorder %v1249, 2
          %v1255 = vxor.u32 %v1245, 2147483648
          %v1256 = vsel %vm1254, %v1255, %v1246
          %v1257 = vsel %vm1250, %v1253, %v1256
          %v1258 = vsel %vm1247, nan, %v1257
          %v1259 = vand.u32 2147483647, %v1154
          %vm1260 = vcmp.le.f32.partialorder %v1259, 0.7853982
          %vm1261 = vcmp.lt.s32.totalorder %v1154, 0
          %v1262 = vand.u32 %v1154, 2139095040
          %v1263 = vshrl.u32 %v1262, 23
          %v1264 = vsub.s32 %v1263, 127
          %v1265 = vand.u32 2147483647, %v1154
          %v1266 = vand.u32 %v1265, 8388607
          %v1267 = vor.u32 %v1266, 8388608
          %v1268 = vsub.s32 0, %v1267
          %v1269 = vadd.s32 %v1264, 1
          %vm1270 = vcmp.gt.s32.totalorder %v1269, 0
          %v1271 = vsel %vm1270, %v1269, 0
          %v1272 = vshrl.u32 %v1271, 5
          %v1273 = vand.u32 %v1271, 31
          %v1274 = vsub.s32 32, %v1273
          %v1275 = vshrl.u32 683565275, %v1274
          %v1276 = vshll.u32 683565275, %v1273
          %v1277 = vshrl.u32 2475754826, %v1274
          %v1278 = vor.u32 %v1276, %v1277
          %v1279 = vshll.u32 2475754826, %v1273
          %v1280 = vshrl.u32 2131351028, %v1274
          %v1281 = vor.u32 %v1279, %v1280
          %v1282 = vshll.u32 2131351028, %v1273
          %v1283 = vshrl.u32 2102212464, %v1274
          %v1284 = vor.u32 %v1282, %v1283
          %v1285 = vshll.u32 2102212464, %v1273
          %v1286 = vshrl.u32 920167782, %v1274
          %v1287 = vor.u32 %v1285, %v1286
          %v1288 = vshll.u32 920167782, %v1273
          %v1289 = vshrl.u32 1326507024, %v1274
          %v1290 = vor.u32 %v1288, %v1289
          %vm1291 = vcmp.lt.s32.totalorder %v1272, 1
          %vm1292 = vcmp.lt.s32.totalorder %v1272, 2
          %vm1293 = vcmp.lt.s32.totalorder %v1272, 3
          %vm1294 = vcmp.lt.s32.totalorder %v1272, 4
          %v1295 = vsel %vm1291, %v1275, %v1278
          %v1296 = vsel %vm1294, %v1284, 2102212464
          %v1297 = vsel %vm1293, %v1281, %v1296
          %v1298 = vsel %vm1292, %v1295, %v1297
          %v1299 = vsel %vm1291, %v1278, %v1281
          %v1300 = vsel %vm1294, %v1287, 920167782
          %v1301 = vsel %vm1293, %v1284, %v1300
          %v1302 = vsel %vm1292, %v1299, %v1301
          %v1303 = vsel %vm1291, %v1281, %v1284
          %v1304 = vsel %vm1294, %v1290, 1326507024
          %v1305 = vsel %vm1293, %v1287, %v1304
          %v1306 = vsel %vm1292, %v1303, %v1305
          %v1307 = vshll.u32 %v1267, 8
          %v1308 = vmul.u32.u64.compose %v1307, %v1306
          %v1309 = vextract.low.u32 %v1308
          %v1310 = vextract.high.u32 %v1308
          %v1311 = vmul.u32.u64.compose %v1307, %v1302
          %v1312 = vextract.low.u32 %v1311
          %v1313 = vextract.high.u32 %v1311
          %v1314 = vmul.u32 %v1307, %v1298
          %v1315 = vadd.s32 %v1310, %v1312
          %vm1316 = vc.u32 %v1310, %v1312
          %v1317 = vadd.s32 %v1313, 1
          %v1318 = vsel %vm1316, %v1317, %v1313
          %v1319 = vadd.s32 %v1314, %v1318
          %v1320 = vadd.s32 %v1319, 536870912
          %v1321 = vshrl.u32 %v1320, 30
          %v1322 = vshll.u32 %v1321, 30
          %v1323 = vsub.s32 %v1319, %v1322
          %vm1324 = vcmp.lt.s32.totalorder %v1323, 0
          %v1325 = vsub.s32 0, %v1323
          %v1326 = vsel %vm1324, %v1325, %v1323
          %v1327 = vclz %v1326
          %v1328 = vsub.s32 %v1327, 2
          %vm1329 = vcmp.gt.s32.totalorder 0, %v1328
          %v1330 = vsel %vm1329, 0, %v1328
          %v1331 = vsub.s32 32, %v1330
          %v1332 = vshll.u32 %v1323, %v1330
          %v1333 = vshrl.u32 %v1315, %v1331
          %v1334 = vor.u32 %v1332, %v1333
          %v1335 = vsub.s32 4294967266, %v1330
          %v1336 = vadd.s32 %v1335, 127
          %v1337 = vshll.u32 %v1336, 23
          %v1338 = vor.u32 4788187, %v1337
          %v1339 = vand.u32 2147483647, %v1338
          %v1341 = vcvt.s32.f32 %v1334
          %v1342 = vmul.f32 %v1341, %v1339
          %v1343 = vxor.u32 %v1342, 2147483648
          %v1344 = vsel %vm1261, %v1343, %v1342
          %v1345 = vsub.s32 4, %v1321
          %v1346 = vsel %vm1261, %v1345, %v1321
          %v1347 = vsel %vm1260, %v1154, %v1344
          %v1348 = vsel %vm1260, 0, %v1346
          %v1349 = vcosq.f32.pop %v1347
          %v1350 = vsinq.f32.pop %v1347
          %vm1351 = vweird.f32 %v1154
          %v1352 = vadd.s32 %v1348, 3
          %v1353 = vand.u32 %v1352, 3
          %vm1354 = vcmp.lt.s32.totalorder %v1353, 2
          %vm1355 = vcmp.eq.s32.totalorder %v1353, 0
          %v1356 = vxor.u32 %v1350, 2147483648
          %v1357 = vsel %vm1355, %v1349, %v1356
          %vm1358 = vcmp.eq.s32.totalorder %v1353, 2
          %v1359 = vxor.u32 %v1349, 2147483648
          %v1360 = vsel %vm1358, %v1359, %v1350
          %v1361 = vsel %vm1354, %v1357, %v1360
          %v1362 = vsel %vm1351, nan, %v1361
          %v1363 = vsel %vm1132, %v1258, %v1153
          %v1364 = vsel %vm1132, %v1362, %v1154
          %v1365 = vstv %s889
          %v1366 = vmul.f32 %v1365, %v1133
          %v1367 = vmul.f32 %v1365, %v1134
          %v1368 = vadd.f32 %v837, %v1366
          %v1369 = vadd.f32 %v843, %v1367
          %v1370 = vstv %s890
          %v1371 = vmul.f32 %v1370, %v1363
          %v1372 = vmul.f32 %v1370, %v1364
          %v1373 = vadd.f32 %v1368, %v1371
          %v1374 = vadd.f32 %v1369, %v1372
          %v1375 = vadd.f32 %v1373, %v887
          %v1376 = vadd.f32 %v1374, %v888
          %vm1377 = vcmask 261120
          %1378 = vst.msk [vmem:[%s317] sm:$0xff] %vm1377, %v1375
          %1379 = vst.msk [vmem:[%s317 + $0x8] sm:$0xff] %vm1377, %v1376
        $region56: #{tpu_custom_call.1} parent=47 // pred_fallthru
          _
        %s1380 = sld [smem:[#allocation2]]
        %p1381 = scmp.eq.s32.totalorder %s1380, 0
        // Predicated region
        $region57: #{tpu_custom_call.1} parent=47 // pred_check
          %p1382 = pneg %p1381
        $region58: #{tpu_custom_call.1} parent=47 // pred_check_branch
          %1384 = sbr.rel (%p1382) target = $region60
        $region59: #{tpu_custom_call.1} parent=47 // pred_region
          %v1385 = vadd.f32 %v837, %v887
          %v1386 = vadd.f32 %v843, %v888
          %vm1387 = vcmask 261120
          %1388 = vst.msk [vmem:[%s317] sm:$0xff] %vm1387, %v1385
          %1389 = vst.msk [vmem:[%s317 + $0x8] sm:$0xff] %vm1387, %v1386
        $region60: #{tpu_custom_call.1} parent=47 // pred_fallthru
          _
        %s1390 = smul.u32 2, %s20
        %p1391 = scmp.lt.s32.totalorder %s1390, 7
        %s1392 = scalar_select %p1391, %s1390, 7
        %s1393 = smul.addr %s1392, 8
        %s1394 = scalar_lea.vmem %s7, %s1393
        // Predicated region
        $region61: #{tpu_custom_call.1} parent=47 // pred_check
          %p1395 = pneg %p195
        $region62: #{tpu_custom_call.1} parent=47 // pred_check_branch
          %1397 = sbr.rel (%p1395) target = $region64
        $region63: #{tpu_custom_call.1} parent=47 // pred_region
          %s1398 = smul.u32 2, %s20
        $region64: #{tpu_custom_call.1} parent=47 // pred_fallthru
          _
      $region48: #{tpu_custom_call.1} parent=5 // pred_fallthru
        _
      %p1399 = scmp.le.s32.totalorder 2, %s15
      // Predicated region
      $region65: #{tpu_custom_call.1} parent=5 // pred_check
        %p1400 = pneg %p1399
      $region66: #{tpu_custom_call.1} parent=5 // pred_check_branch
        %1402 = sbr.rel (%p1400) target = $region68
      $region67: #{tpu_custom_call.1} parent=5 // pred_region
        %s1403 = ssub.s32 %s15, 2
        // Predicated region
        $region69: #{tpu_custom_call.1} parent=67 // pred_check
          %p1404 = pneg %p201
        $region70: #{tpu_custom_call.1} parent=67 // pred_check_branch
          %1406 = sbr.rel (%p1404) target = $region72
        $region71: #{tpu_custom_call.1} parent=67 // pred_region
          %s1407 = smul.u32 2, %s21
          %p1408 = scmp.lt.s32.totalorder %s1407, 7
          %s1409 = scalar_select %p1408, %s1407, 7
          %s1410 = smul.addr %s1409, 8
          %s1411 = scalar_lea.vmem %s7, %s1410
        $region72: #{tpu_custom_call.1} parent=67 // pred_fallthru
          _
      $region68: #{tpu_custom_call.1} parent=5 // pred_fallthru
        _
    $region6: #{tpu_custom_call.1} parent=1 // loop_footer
      %s19 = sadd.s32 1, %s15
    $region7: #{tpu_custom_call.1} parent=1 // loop_footer_branch
      %14 = sbr.rel target = $region3
    $region8: #{tpu_custom_call.1} parent=1 // loop_exit
      _
    %1412 = vsyncpa [#allocation4], 1
    %s1413 = scalar_lea.sflag [#allocation4], 1
    %1414 = vsyncpa %s1413, 1

</llo_original>
